<compile_context>
chip_gen: v5e
topology: v5e:2x2
jax: 0.10.0
libtpu: 0.0.40
codegen_flags: <defaults>
</compile_context>

<pallas_src>
import functools

import jax
import jax.numpy as jnp
import numpy as np
from jax.experimental import pallas as pl
from jax.experimental.pallas import tpu as pltpu


def _interp_matrix(out_size: int, in_size: int) -> jnp.ndarray:
    """Dense 1-D bilinear interpolation matrix matching nn.Upsample(mode='bilinear',
    align_corners=False)."""
    scale = out_size / in_size
    dst = jnp.arange(out_size, dtype=jnp.float32)
    src = jnp.maximum((dst + 0.5) / scale - 0.5, 0.0)
    i0 = jnp.minimum(jnp.floor(src).astype(jnp.int32), in_size - 1)
    i1 = jnp.minimum(i0 + 1, in_size - 1)
    lam = src - i0.astype(jnp.float32)
    m = (jax.nn.one_hot(i0, in_size, dtype=jnp.float32) * (1.0 - lam)[:, None]
         + jax.nn.one_hot(i1, in_size, dtype=jnp.float32) * lam[:, None])
    return m  # (out_size, in_size)


def _dfi_kernel(x_ref, bdh_ref, uwt_ref, w_ref, b_ref, o_ref, *, cin, ho, wo, pf):
    # x_ref   : (Cin*H, W)        input image, channels folded into rows
    # bdh_ref : (Cin*Ho, Cin*H)   block-diag height-interp operator (rows perm-ordered (c, r, p2))
    # uwt_ref : (W, Wo)           width-interp matrix, transposed
    # w_ref   : (Cout, Cin)       1x1 conv weight with BN scale folded in
    # b_ref   : (Cout, 1)         fused BN/conv bias
    # o_ref   : (Cout, Ho*Wo)     lane-dense output block
    # --- bilinear 4x upsample as two single 2-D MXU matmuls ---
    t = jnp.dot(bdh_ref[...], x_ref[...], preferred_element_type=jnp.float32)   # (Cin*Ho, W)
    t = jnp.dot(t, uwt_ref[...], preferred_element_type=jnp.float32)            # (Cin*Ho, Wo)
    # --- ReLU ---
    t = jnp.maximum(t, 0.0)
    # --- relayout [(c, r, p2), q] -> (Cin, Ho*Wo): tile-aligned slices + lane concat +
    #     128-aligned reshape (pf*Wo == 128 for the test shapes) ---
    half = ho // pf
    cols = []
    for c in range(cin):
        base = c * ho
        pieces = [t[base + r * half: base + (r + 1) * half, :] for r in range(pf)]
        cols.append(pieces[0] if pf == 1 else jnp.concatenate(pieces, axis=-1))  # (half, pf*Wo)
    u2 = cols[0] if cin == 1 else jnp.concatenate(cols, axis=0)                  # (Cin*half, pf*Wo)
    rhs = u2.reshape(cin, ho * wo)                                               # (Cin, Ho*Wo)
    # --- 1x1 conv (BN scale already folded into w) as one 2-D MXU matmul, then +bias ---
    out = jnp.dot(w_ref[...], rhs, preferred_element_type=jnp.float32)           # (Cout, Ho*Wo)
    out = out + b_ref[...]
    o_ref[...] = out.astype(o_ref.dtype)                                         # dense, unmasked store


def double_factorized_increase(x, conv_w, conv_b, gamma, beta,
                               running_mean, running_var, eps=1e-5,
                               out_dtype=jnp.float32):
    N, Cin, H, W = x.shape
    Cout = conv_w.shape[0]
    Ho, Wo = 4 * H, 4 * W

    # Pack pf consecutive output rows per lane group so the in-kernel row->lane merge is
    # 128-lane aligned (pf*Wo == 128 when possible).
    if Wo % 128 == 0:
        pf = 1
    elif 128 % Wo == 0 and Ho % (128 // Wo) == 0:
        pf = 128 // Wo
    else:
        pf = 1

    uh = _interp_matrix(Ho, H)                                  # (Ho, H)
    if pf > 1:  # pre-permute rows to (r, p2) order; the kernel undoes it during the relayout
        uh = jnp.concatenate([uh[r::pf, :] for r in range(pf)], axis=0)
    bdh = jnp.kron(jnp.eye(Cin, dtype=jnp.float32), uh)         # (Cin*Ho, Cin*H)
    uwT = _interp_matrix(Wo, W).T                               # (W, Wo)

    # Fold eval-mode BatchNorm (+ conv bias) into the conv weight / a per-channel bias.
    s = gamma / jnp.sqrt(running_var + eps)
    w_fold = (s[:, None] * conv_w.reshape(Cout, Cin)).astype(jnp.float32)          # (Cout, Cin)
    b_fold = (beta + s * (conv_b - running_mean)).reshape(Cout, 1).astype(jnp.float32)

    kernel = functools.partial(_dfi_kernel, cin=Cin, ho=Ho, wo=Wo, pf=pf)

    out = pl.pallas_call(
        kernel,
        out_shape=jax.ShapeDtypeStruct((N, Cout, Ho * Wo), out_dtype),
        grid=(N,),
        in_specs=[
            pl.BlockSpec((None, Cin * H, W), lambda n: (n, 0, 0)),     # x (batch-squeezed)
            pl.BlockSpec((Cin * Ho, Cin * H), lambda n: (0, 0)),       # block-diag height interp
            pl.BlockSpec((W, Wo), lambda n: (0, 0)),                   # width interp (transposed)
            pl.BlockSpec((Cout, Cin), lambda n: (0, 0)),               # BN-folded conv weight
            pl.BlockSpec((Cout, 1), lambda n: (0, 0)),                 # fused bias
        ],
        out_specs=pl.BlockSpec((None, Cout, Ho * Wo), lambda n: (n, 0, 0)),  # lane-dense output
        compiler_params=pltpu.CompilerParams(dimension_semantics=("parallel",)),
    )(x.reshape(N, Cin * H, W).astype(jnp.float32), bdh, uwT, w_fold, b_fold)

    return out.reshape(N, Cout, Ho, Wo)  # free contiguous reshape back to NCHW


def reference_forward(x, conv_w, conv_b, gamma, beta, mean, var, eps=1e-5):
    """Plain-JAX reference of the same semantics (for a sanity check)."""
    N, Cin, H, W = x.shape
    Cout = conv_w.shape[0]
    uh = _interp_matrix(4 * H, H)
    uw = _interp_matrix(4 * W, W)
    up = jnp.einsum('ph,nchw->ncpw', uh, x)
    up = jnp.einsum('qw,ncpw->ncpq', uw, up)
    up = jnp.maximum(up, 0.0)
    y = jnp.einsum('oc,ncpq->nopq', conv_w.reshape(Cout, Cin), up)
    y = y + conv_b[None, :, None, None]
    s = gamma / jnp.sqrt(var + eps)
    return (y - mean[None, :, None, None]) * s[None, :, None, None] + beta[None, :, None, None]


if __name__ == "__main__":
    key = jax.random.PRNGKey(0)
    k_x, k_w, k_b = jax.random.split(key, 3)

    N, Cin, Cout, H, W = 2, 4, 8, 16, 16
    x = jax.random.normal(k_x, (N, Cin, H, W), dtype=jnp.float32)

    # deterministic parameter init (synthetic; not a checkpoint load)
    conv_w = 0.1 * jax.random.normal(k_w, (Cout, Cin, 1, 1), dtype=jnp.float32)
    conv_b = 0.1 * jax.random.normal(k_b, (Cout,), dtype=jnp.float32)
    gamma = jnp.ones((Cout,), dtype=jnp.float32)          # BatchNorm2d default init
    beta = jnp.zeros((Cout,), dtype=jnp.float32)
    running_mean = jnp.zeros((Cout,), dtype=jnp.float32)
    running_var = jnp.ones((Cout,), dtype=jnp.float32)

    out = double_factorized_increase(x, conv_w, conv_b, gamma, beta,
                                     running_mean, running_var)
    out = jax.block_until_ready(out)

    ref = reference_forward(x, conv_w, conv_b, gamma, beta,
                            running_mean, running_var)
    assert out.shape == (N, Cout, 4 * H, 4 * W), out.shape
    np.testing.assert_allclose(np.asarray(out), np.asarray(ref), rtol=1e-4, atol=1e-5)

    print("KERNEL_OK")
</pallas_src>

<mosaic_0001>
module attributes {stable_mosaic.version = 11 : i64} {
  func.func @_dfi_kernel(%arg0: i32, %arg1: memref<1x64x16xf32, #tpu.memory_space<vmem>>, %arg2: memref<256x64xf32, #tpu.memory_space<vmem>>, %arg3: memref<16x64xf32, #tpu.memory_space<vmem>>, %arg4: memref<8x4xf32, #tpu.memory_space<vmem>>, %arg5: memref<8x1xf32, #tpu.memory_space<vmem>>, %arg6: memref<1x8x4096xf32, #tpu.memory_space<vmem>>) attributes {dimension_semantics = [#tpu.dimension_semantics<parallel>], iteration_bounds = array<i64: 2>, scalar_prefetch = 0 : i64, scratch_operands = 0 : i64, tpu.core_type = #tpu.core_type<tc>, window_params = [{transform_indices = @transform_0, window_bounds = array<i64: 1, 64, 16>}, {pipeline_mode = #tpu.pipeline_mode<synchronous>, transform_indices = @transform_1, window_bounds = array<i64: 256, 64>}, {pipeline_mode = #tpu.pipeline_mode<synchronous>, transform_indices = @transform_2, window_bounds = array<i64: 16, 64>}, {pipeline_mode = #tpu.pipeline_mode<synchronous>, transform_indices = @transform_3, window_bounds = array<i64: 8, 4>}, {pipeline_mode = #tpu.pipeline_mode<synchronous>, transform_indices = @transform_4, window_bounds = array<i64: 8, 1>}, {transform_indices = @transform_5, window_bounds = array<i64: 1, 8, 4096>}]} {
    %c0 = arith.constant 0 : index
    %c0_0 = arith.constant 0 : index
    %0 = vector.load %arg2[%c0, %c0_0] : memref<256x64xf32, #tpu.memory_space<vmem>>, vector<256x64xf32>
    %c0_1 = arith.constant 0 : index
    %c0_2 = arith.constant 0 : index
    %c0_3 = arith.constant 0 : index
    %1 = vector.load %arg1[%c0_1, %c0_2, %c0_3] : memref<1x64x16xf32, #tpu.memory_space<vmem>>, vector<1x64x16xf32>
    %2 = vector.shape_cast %1 : vector<1x64x16xf32> to vector<64x16xf32>
    %cst = arith.constant dense<0.000000e+00> : vector<256x16xf32>
    %3 = tpu.matmul %0, %2, %cst {dimension_numbers = #tpu.dot_dimension_numbers<[1], [0], [0], [1], [0, 0, 1, 1], [], []>} : vector<256x64xf32>, vector<64x16xf32>, vector<256x16xf32> -> vector<256x16xf32>
    %c0_4 = arith.constant 0 : index
    %c0_5 = arith.constant 0 : index
    %4 = vector.load %arg3[%c0_4, %c0_5] : memref<16x64xf32, #tpu.memory_space<vmem>>, vector<16x64xf32>
    %cst_6 = arith.constant dense<0.000000e+00> : vector<256x64xf32>
    %5 = tpu.matmul %3, %4, %cst_6 {dimension_numbers = #tpu.dot_dimension_numbers<[1], [0], [0], [1], [0, 0, 1, 1], [], []>} : vector<256x16xf32>, vector<16x64xf32>, vector<256x64xf32> -> vector<256x64xf32>
    %cst_7 = arith.constant 0.000000e+00 : f32
    %6 = vector.broadcast %cst_7 : f32 to vector<256x64xf32>
    %7 = arith.maximumf %5, %6 : vector<256x64xf32>
    %8 = vector.extract_strided_slice %7 {offsets = [0, 0], sizes = [32, 64], strides = [1, 1]} : vector<256x64xf32> to vector<32x64xf32>
    %9 = vector.extract_strided_slice %7 {offsets = [32, 0], sizes = [32, 64], strides = [1, 1]} : vector<256x64xf32> to vector<32x64xf32>
    %10 = tpu.concatenate %8, %9 in 1 : vector<32x64xf32>, vector<32x64xf32> -> vector<32x128xf32>
    %11 = vector.extract_strided_slice %7 {offsets = [64, 0], sizes = [32, 64], strides = [1, 1]} : vector<256x64xf32> to vector<32x64xf32>
    %12 = vector.extract_strided_slice %7 {offsets = [96, 0], sizes = [32, 64], strides = [1, 1]} : vector<256x64xf32> to vector<32x64xf32>
    %13 = tpu.concatenate %11, %12 in 1 : vector<32x64xf32>, vector<32x64xf32> -> vector<32x128xf32>
    %14 = vector.extract_strided_slice %7 {offsets = [128, 0], sizes = [32, 64], strides = [1, 1]} : vector<256x64xf32> to vector<32x64xf32>
    %15 = vector.extract_strided_slice %7 {offsets = [160, 0], sizes = [32, 64], strides = [1, 1]} : vector<256x64xf32> to vector<32x64xf32>
    %16 = tpu.concatenate %14, %15 in 1 : vector<32x64xf32>, vector<32x64xf32> -> vector<32x128xf32>
    %17 = vector.extract_strided_slice %7 {offsets = [192, 0], sizes = [32, 64], strides = [1, 1]} : vector<256x64xf32> to vector<32x64xf32>
    %18 = vector.extract_strided_slice %7 {offsets = [224, 0], sizes = [32, 64], strides = [1, 1]} : vector<256x64xf32> to vector<32x64xf32>
    %19 = tpu.concatenate %17, %18 in 1 : vector<32x64xf32>, vector<32x64xf32> -> vector<32x128xf32>
    %20 = tpu.concatenate %10, %13, %16, %19 in 0 : vector<32x128xf32>, vector<32x128xf32>, vector<32x128xf32>, vector<32x128xf32> -> vector<128x128xf32>
    %21 = vector.shape_cast %20 : vector<128x128xf32> to vector<4x4096xf32>
    %c0_8 = arith.constant 0 : index
    %c0_9 = arith.constant 0 : index
    %22 = vector.load %arg4[%c0_8, %c0_9] : memref<8x4xf32, #tpu.memory_space<vmem>>, vector<8x4xf32>
    %cst_10 = arith.constant dense<0.000000e+00> : vector<8x4096xf32>
    %23 = tpu.matmul %22, %21, %cst_10 {dimension_numbers = #tpu.dot_dimension_numbers<[1], [0], [0], [1], [0, 0, 1, 1], [], []>} : vector<8x4xf32>, vector<4x4096xf32>, vector<8x4096xf32> -> vector<8x4096xf32>
    %c0_11 = arith.constant 0 : index
    %c0_12 = arith.constant 0 : index
    %24 = vector.load %arg5[%c0_11, %c0_12] : memref<8x1xf32, #tpu.memory_space<vmem>>, vector<8x1xf32>
    %25 = vector.broadcast %24 : vector<8x1xf32> to vector<8x4096xf32>
    %26 = arith.addf %23, %25 : vector<8x4096xf32>
    %c0_13 = arith.constant 0 : index
    %c0_14 = arith.constant 0 : index
    %c0_15 = arith.constant 0 : index
    %27 = vector.load %arg6[%c0_13, %c0_14, %c0_15] : memref<1x8x4096xf32, #tpu.memory_space<vmem>>, vector<1x8x4096xf32>
    %28 = vector.shape_cast %27 : vector<1x8x4096xf32> to vector<8x4096xf32>
    %29 = vector.shape_cast %26 : vector<8x4096xf32> to vector<1x8x4096xf32>
    tpu.vector_store %arg6[%c0_13, %c0_14, %c0_15], %29 {strides = array<i32>} : memref<1x8x4096xf32, #tpu.memory_space<vmem>>, vector<1x8x4096xf32>,
    return
  }
  func.func @transform_0(%arg0: i32) -> (i32, i32, i32) {
    %c0_i32 = arith.constant 0 : i32
    %c0_i32_0 = arith.constant 0 : i32
    %c0_i32_1 = arith.constant 0 : i32
    return %arg0, %c0_i32, %c0_i32_0 : i32, i32, i32
  }
  func.func @transform_1(%arg0: i32) -> (i32, i32) {
    %c0_i32 = arith.constant 0 : i32
    %c0_i32_0 = arith.constant 0 : i32
    %c0_i32_1 = arith.constant 0 : i32
    return %c0_i32, %c0_i32_0 : i32, i32
  }
  func.func @transform_2(%arg0: i32) -> (i32, i32) {
    %c0_i32 = arith.constant 0 : i32
    %c0_i32_0 = arith.constant 0 : i32
    %c0_i32_1 = arith.constant 0 : i32
    return %c0_i32, %c0_i32_0 : i32, i32
  }
  func.func @transform_3(%arg0: i32) -> (i32, i32) {
    %c0_i32 = arith.constant 0 : i32
    %c0_i32_0 = arith.constant 0 : i32
    %c0_i32_1 = arith.constant 0 : i32
    return %c0_i32, %c0_i32_0 : i32, i32
  }
  func.func @transform_4(%arg0: i32) -> (i32, i32) {
    %c0_i32 = arith.constant 0 : i32
    %c0_i32_0 = arith.constant 0 : i32
    %c0_i32_1 = arith.constant 0 : i32
    return %c0_i32, %c0_i32_0 : i32, i32
  }
  func.func @transform_5(%arg0: i32) -> (i32, i32, i32) {
    %c0_i32 = arith.constant 0 : i32
    %c0_i32_0 = arith.constant 0 : i32
    %c0_i32_1 = arith.constant 0 : i32
    return %arg0, %c0_i32, %c0_i32_0 : i32, i32, i32
  }
}

</mosaic_0001>

<llo_original>
// kernel: tpu_custom_call.1
$region0: #{tpu_custom_call.1}
  #allocation0 [shape = 'u32[]', space=smem, size = 0x4, offset = 0x4, fixed_abs, tag = 'smem constant byte address 0x4 - core index']
  #allocation1 [shape = 'u32[72,128]{1,0:T(1,128)}', space=vmem, size = 0x9000, scoped, tag = 'internal scratch']
  %s0 = inlined_call_operand.vmem [shape: f32[2,64,16], index: 0, kind: input, shape index: {}]
  %s1 = inlined_call_operand.vmem [shape: f32[256,64], index: 1, kind: input, shape index: {}]
  %s2 = inlined_call_operand.vmem [shape: f32[16,64], index: 2, kind: input, shape index: {}]
  %s3 = inlined_call_operand.vmem [shape: f32[8,4], index: 3, kind: input, shape index: {}]
  %s4 = inlined_call_operand.vmem [shape: f32[8,1], index: 4, kind: input, shape index: {}]
  %s5 = inlined_call_operand.hbm [shape: f32[2,8,4096], index: 5, kind: output, shape index: {}]
  %s6 = sld [smem:[#allocation0]]
  $region53: #{tpu_custom_call.1} parent=0
    _
  %s8 = ssub.s32 1, %s6
  %s9 = scalar_select 0, %s8, %s6
  $region1: #{tpu_custom_call.1} parent=0
    #allocation2 [shape = 'u8[262144]{0}', space=vmem, size = 0x40000, scoped, tag = 'output window, operand 0']
    #allocation3 [shape = 's32[2]{0}', space=sflag, size = 0x8, scoped, tag = 'scoped memory for tpu_custom_call.1']
    %10 = vsyncpa [#allocation3], 0
    %s11 = scalar_lea.sflag [#allocation3], 1
    %12 = vsyncpa %s11, 0
    loop: start=0, step=1, limit=4
    $region2: #{tpu_custom_call.1} parent=1 // loop_pre_header
      _
    $region3: #{tpu_custom_call.1} parent=1 // loop_header
      %s14 = sphi 0, %s18
      %p15 = scmp.ge.s32.totalorder %s14, 4
      %s24 = sphi 0, %s26
      %s27 = sphi 0, %s24
      %s28 = sphi 0, %s27
      %s44 = sphi 0, %s28
      %s48 = sphi 0, %s48
      %s50 = sphi 0, %s48
      %s51 = sphi 0, %s50
      %s65 = sphi 0, %s51
      %s69 = sphi 0, %s69
      %s71 = sphi 0, %s69
      %s72 = sphi 0, %s71
      %s86 = sphi 0, %s72
      %s90 = sphi 0, %s90
      %s92 = sphi 0, %s90
      %s93 = sphi 0, %s92
      %s107 = sphi 0, %s93
      %s111 = sphi 0, %s111
      %s113 = sphi 0, %s111
      %s114 = sphi 0, %s113
      %s128 = sphi 0, %s114
      %s134 = sphi 0, %s136
      %s137 = sphi 0, %s134
      %s138 = sphi 0, %s137
      %s154 = sphi 0, %s138
    $region4: #{tpu_custom_call.1} parent=1 // loop_header_branch
      %17 = sbr.rel (%p15) target = $region8
    $region5: #{tpu_custom_call.1} parent=1 // loop_body
      %s19 = ssub.s32 %s14, 1
      %s20 = ssub.s32 %s14, 2
      %s21 = sadd.s32 %s14, 1
      %s22 = ssub.s32 %s14, %s21
      %p23 = scmp.eq.s32.totalorder %s22, 0
      %s25 = sadd.s32 %s24, 1
      %s26 = scalar_select %p23, %s24, %s25
      %p29 = pneg %p23
      %p30 = scmp.eq.s32.totalorder %s14, 1
      %p31 = por %p29, %p30
      %p32 = scmp.ne.s32.totalorder %s24, %s27
      %p33 = scmp.eq.s32.totalorder %s14, 0
      %p34 = por %p32, %p33
      %p35 = scmp.ne.s32.totalorder %s24, %s27
      %p36 = scmp.eq.s32.totalorder %s19, 1
      %p37 = por %p35, %p36
      %p38 = scmp.ne.s32.totalorder %s27, %s28
      %p39 = scmp.eq.s32.totalorder %s19, 0
      %p40 = por %p38, %p39
      %p41 = scmp.ne.s32.totalorder %s27, %s28
      %p42 = scmp.eq.s32.totalorder %s20, 1
      %p43 = por %p41, %p42
      %p45 = scmp.ne.s32.totalorder %s28, %s44
      %p46 = scmp.eq.s32.totalorder %s20, 0
      %p47 = por %p45, %p46
      %s49 = sadd.s32 %s48, 1
      %p52 = scmp.eq.s32.totalorder %s14, 1
      %p53 = scmp.ne.s32.totalorder %s48, %s50
      %p54 = scmp.eq.s32.totalorder %s14, 0
      %p55 = por %p53, %p54
      %p56 = scmp.ne.s32.totalorder %s48, %s50
      %p57 = scmp.eq.s32.totalorder %s19, 1
      %p58 = por %p56, %p57
      %p59 = scmp.ne.s32.totalorder %s50, %s51
      %p60 = scmp.eq.s32.totalorder %s19, 0
      %p61 = por %p59, %p60
      %p62 = scmp.ne.s32.totalorder %s50, %s51
      %p63 = scmp.eq.s32.totalorder %s20, 1
      %p64 = por %p62, %p63
      %p66 = scmp.ne.s32.totalorder %s51, %s65
      %p67 = scmp.eq.s32.totalorder %s20, 0
      %p68 = por %p66, %p67
      %s70 = sadd.s32 %s69, 1
      %p73 = scmp.eq.s32.totalorder %s14, 1
      %p74 = scmp.ne.s32.totalorder %s69, %s71
      %p75 = scmp.eq.s32.totalorder %s14, 0
      %p76 = por %p74, %p75
      %p77 = scmp.ne.s32.totalorder %s69, %s71
      %p78 = scmp.eq.s32.totalorder %s19, 1
      %p79 = por %p77, %p78
      %p80 = scmp.ne.s32.totalorder %s71, %s72
      %p81 = scmp.eq.s32.totalorder %s19, 0
      %p82 = por %p80, %p81
      %p83 = scmp.ne.s32.totalorder %s71, %s72
      %p84 = scmp.eq.s32.totalorder %s20, 1
      %p85 = por %p83, %p84
      %p87 = scmp.ne.s32.totalorder %s72, %s86
      %p88 = scmp.eq.s32.totalorder %s20, 0
      %p89 = por %p87, %p88
      %s91 = sadd.s32 %s90, 1
      %p94 = scmp.eq.s32.totalorder %s14, 1
      %p95 = scmp.ne.s32.totalorder %s90, %s92
      %p96 = scmp.eq.s32.totalorder %s14, 0
      %p97 = por %p95, %p96
      %p98 = scmp.ne.s32.totalorder %s90, %s92
      %p99 = scmp.eq.s32.totalorder %s19, 1
      %p100 = por %p98, %p99
      %p101 = scmp.ne.s32.totalorder %s92, %s93
      %p102 = scmp.eq.s32.totalorder %s19, 0
      %p103 = por %p101, %p102
      %p104 = scmp.ne.s32.totalorder %s92, %s93
      %p105 = scmp.eq.s32.totalorder %s20, 1
      %p106 = por %p104, %p105
      %p108 = scmp.ne.s32.totalorder %s93, %s107
      %p109 = scmp.eq.s32.totalorder %s20, 0
      %p110 = por %p108, %p109
      %s112 = sadd.s32 %s111, 1
      %p115 = scmp.eq.s32.totalorder %s14, 1
      %p116 = scmp.ne.s32.totalorder %s111, %s113
      %p117 = scmp.eq.s32.totalorder %s14, 0
      %p118 = por %p116, %p117
      %p119 = scmp.ne.s32.totalorder %s111, %s113
      %p120 = scmp.eq.s32.totalorder %s19, 1
      %p121 = por %p119, %p120
      %p122 = scmp.ne.s32.totalorder %s113, %s114
      %p123 = scmp.eq.s32.totalorder %s19, 0
      %p124 = por %p122, %p123
      %p125 = scmp.ne.s32.totalorder %s113, %s114
      %p126 = scmp.eq.s32.totalorder %s20, 1
      %p127 = por %p125, %p126
      %p129 = scmp.ne.s32.totalorder %s114, %s128
      %p130 = scmp.eq.s32.totalorder %s20, 0
      %p131 = por %p129, %p130
      %s132 = ssub.s32 %s14, %s21
      %p133 = scmp.eq.s32.totalorder %s132, 0
      %s135 = sadd.s32 %s134, 1
      %s136 = scalar_select %p133, %s134, %s135
      %p139 = pneg %p133
      %p140 = scmp.eq.s32.totalorder %s14, 1
      %p141 = por %p139, %p140
      %p142 = scmp.ne.s32.totalorder %s134, %s137
      %p143 = scmp.eq.s32.totalorder %s14, 0
      %p144 = por %p142, %p143
      %p145 = scmp.ne.s32.totalorder %s134, %s137
      %p146 = scmp.eq.s32.totalorder %s19, 1
      %p147 = por %p145, %p146
      %p148 = scmp.ne.s32.totalorder %s137, %s138
      %p149 = scmp.eq.s32.totalorder %s19, 0
      %p150 = por %p148, %p149
      %p151 = scmp.ne.s32.totalorder %s137, %s138
      %p152 = scmp.eq.s32.totalorder %s20, 1
      %p153 = por %p151, %p152
      %p155 = scmp.ne.s32.totalorder %s138, %s154
      %p156 = scmp.eq.s32.totalorder %s20, 0
      %p157 = por %p155, %p156
      %p158 = scmp.le.s32.totalorder 1, %s14
      %p159 = scmp.lt.s32.totalorder %s14, 3
      %p160 = pnand %p158, %p159
      %p161 = pneg %p160
      // Predicated region
      $region9: #{tpu_custom_call.1} parent=5 // pred_check
        _
      $region10: #{tpu_custom_call.1} parent=5 // pred_check_branch
        %163 = sbr.rel (%p160) target = $region12
      $region11: #{tpu_custom_call.1} parent=5 // pred_region
        %s164 = ssub.s32 %s14, 1
        // Predicated region
        $region13: #{tpu_custom_call.1} parent=11 // pred_check
          %p165 = pneg %p61
        $region14: #{tpu_custom_call.1} parent=11 // pred_check_branch
          %167 = sbr.rel (%p165) target = $region16
        $region15: #{tpu_custom_call.1} parent=11 // pred_region
          _
        $region16: #{tpu_custom_call.1} parent=11 // pred_fallthru
          _
        // Predicated region
        $region17: #{tpu_custom_call.1} parent=11 // pred_check
          %p168 = pneg %p82
        $region18: #{tpu_custom_call.1} parent=11 // pred_check_branch
          %170 = sbr.rel (%p168) target = $region20
        $region19: #{tpu_custom_call.1} parent=11 // pred_region
          _
        $region20: #{tpu_custom_call.1} parent=11 // pred_fallthru
          _
        // Predicated region
        $region21: #{tpu_custom_call.1} parent=11 // pred_check
          %p171 = pneg %p103
        $region22: #{tpu_custom_call.1} parent=11 // pred_check_branch
          %173 = sbr.rel (%p171) target = $region24
        $region23: #{tpu_custom_call.1} parent=11 // pred_region
          _
        $region24: #{tpu_custom_call.1} parent=11 // pred_fallthru
          _
        // Predicated region
        $region25: #{tpu_custom_call.1} parent=11 // pred_check
          %p174 = pneg %p124
        $region26: #{tpu_custom_call.1} parent=11 // pred_check_branch
          %176 = sbr.rel (%p174) target = $region28
        $region27: #{tpu_custom_call.1} parent=11 // pred_region
          _
        $region28: #{tpu_custom_call.1} parent=11 // pred_fallthru
          _
      $region12: #{tpu_custom_call.1} parent=5 // pred_fallthru
        _
      %p177 = scmp.lt.s32.totalorder %s14, 2
      // Predicated region
      $region29: #{tpu_custom_call.1} parent=5 // pred_check
        %p178 = pneg %p177
      $region30: #{tpu_custom_call.1} parent=5 // pred_check_branch
        %180 = sbr.rel (%p178) target = $region32
      $region31: #{tpu_custom_call.1} parent=5 // pred_region
        // Predicated region
        $region33: #{tpu_custom_call.1} parent=31 // pred_check
          %p181 = pneg %p34
        $region34: #{tpu_custom_call.1} parent=31 // pred_check_branch
          %183 = sbr.rel (%p181) target = $region36
        $region35: #{tpu_custom_call.1} parent=31 // pred_region
          %p184 = scmp.lt.s32.totalorder %s14, 1
          %s185 = scalar_select %p184, %s14, 1
          %s186 = smul.addr %s185, 8
          %s187 = smul.addr %s186, 8
          %s188 = scalar_lea.vmem %s0, %s187
        $region36: #{tpu_custom_call.1} parent=31 // pred_fallthru
          _
      $region32: #{tpu_custom_call.1} parent=5 // pred_fallthru
        _
      %p189 = scmp.le.s32.totalorder 1, %s14
      %p190 = scmp.lt.s32.totalorder %s14, 3
      %p191 = pnand %p189, %p190
      %p192 = pneg %p191
      // Predicated region
      $region37: #{tpu_custom_call.1} parent=5 // pred_check
        _
      $region38: #{tpu_custom_call.1} parent=5 // pred_check_branch
        %194 = sbr.rel (%p191) target = $region40
      $region39: #{tpu_custom_call.1} parent=5 // pred_region
        %s195 = ssub.s32 %s14, 1
        %p196 = scmp.lt.s32.totalorder %s19, 1
        %s197 = scalar_select %p196, %s19, 1
        %s198 = smul.addr %s197, 8
        %s199 = smul.addr %s198, 8
        %s200 = scalar_lea.vmem %s0, %s199
        %p201 = pneg %p40
        %p202 = pneg %p37
        %p203 = pneg %p61
        %p204 = pneg %p58
        %p205 = pneg %p82
        %p206 = pneg %p79
        %p207 = pneg %p103
        %p208 = pneg %p100
        %p209 = pneg %p124
        %p210 = pneg %p121
        %p211 = pneg %p150
        %p212 = pneg %p147
        %s213 = sand.u32 %s137, 1
        %s214 = scalar_lea.sflag [#allocation3], %s213
        %s215 = sand.u32 %s137, 1
        %s216 = smul.addr %s215, 256
        %s217 = scalar_lea.vmem [#allocation2], %s216
        %p218 = scmp.lt.s32.totalorder %s19, 1
        %s219 = scalar_select %p218, %s19, 1
        %s220 = smul.addr %s219, 8
        %s221 = smul.addr %s220, 8
        %s222 = scalar_lea.vmem %s0, %s221
        %v223 = vld [vmem:[%s1] sm:$0xff]
        %v224 = vld [vmem:[%s1 + $0x8] sm:$0xff]
        %v225 = vld [vmem:[%s1 + $0x10] sm:$0xff]
        %v226 = vld [vmem:[%s1 + $0x18] sm:$0xff]
        %v227 = vld [vmem:[%s1 + $0x20] sm:$0xff]
        %v228 = vld [vmem:[%s1 + $0x28] sm:$0xff]
        %v229 = vld [vmem:[%s1 + $0x30] sm:$0xff]
        %v230 = vld [vmem:[%s1 + $0x38] sm:$0xff]
        %v231 = vld [vmem:[%s1 + $0x40] sm:$0xff]
        %v232 = vld [vmem:[%s1 + $0x48] sm:$0xff]
        %v233 = vld [vmem:[%s1 + $0x50] sm:$0xff]
        %v234 = vld [vmem:[%s1 + $0x58] sm:$0xff]
        %v235 = vld [vmem:[%s1 + $0x60] sm:$0xff]
        %v236 = vld [vmem:[%s1 + $0x68] sm:$0xff]
        %v237 = vld [vmem:[%s1 + $0x70] sm:$0xff]
        %v238 = vld [vmem:[%s1 + $0x78] sm:$0xff]
        %v239 = vld [vmem:[%s1 + $0x80] sm:$0xff]
        %v240 = vld [vmem:[%s1 + $0x88] sm:$0xff]
        %v241 = vld [vmem:[%s1 + $0x90] sm:$0xff]
        %v242 = vld [vmem:[%s1 + $0x98] sm:$0xff]
        %v243 = vld [vmem:[%s1 + $0xa0] sm:$0xff]
        %v244 = vld [vmem:[%s1 + $0xa8] sm:$0xff]
        %v245 = vld [vmem:[%s1 + $0xb0] sm:$0xff]
        %v246 = vld [vmem:[%s1 + $0xb8] sm:$0xff]
        %v247 = vld [vmem:[%s1 + $0xc0] sm:$0xff]
        %v248 = vld [vmem:[%s1 + $0xc8] sm:$0xff]
        %v249 = vld [vmem:[%s1 + $0xd0] sm:$0xff]
        %v250 = vld [vmem:[%s1 + $0xd8] sm:$0xff]
        %v251 = vld [vmem:[%s1 + $0xe0] sm:$0xff]
        %v252 = vld [vmem:[%s1 + $0xe8] sm:$0xff]
        %v253 = vld [vmem:[%s1 + $0xf0] sm:$0xff]
        %v254 = vld [vmem:[%s1 + $0xf8] sm:$0xff]
        %v255 = vld [vmem:[%s222] sm:$0xff]
        %v256 = vld [vmem:[%s222 + $0x8] sm:$0xff]
        %v257 = vld [vmem:[%s222 + $0x10] sm:$0xff]
        %v258 = vld [vmem:[%s222 + $0x18] sm:$0xff]
        %v259 = vld [vmem:[%s222 + $0x20] sm:$0xff]
        %v260 = vld [vmem:[%s222 + $0x28] sm:$0xff]
        %v261 = vld [vmem:[%s222 + $0x30] sm:$0xff]
        %v262 = vld [vmem:[%s222 + $0x38] sm:$0xff]
        %vm263 = vcmask 523264
        %v265 = vsel %vm263, %v223, 0
        %v268 = vsel %vm263, %v224, 0
        %v271 = vsel %vm263, %v225, 0
        %v274 = vsel %vm263, %v226, 0
        %v277 = vsel %vm263, %v227, 0
        %v280 = vsel %vm263, %v228, 0
        %v283 = vsel %vm263, %v229, 0
        %v286 = vsel %vm263, %v230, 0
        %v289 = vsel %vm263, %v231, 0
        %v292 = vsel %vm263, %v232, 0
        %v295 = vsel %vm263, %v233, 0
        %v298 = vsel %vm263, %v234, 0
        %v301 = vsel %vm263, %v235, 0
        %v304 = vsel %vm263, %v236, 0
        %v307 = vsel %vm263, %v237, 0
        %v310 = vsel %vm263, %v238, 0
        %v313 = vsel %vm263, %v239, 0
        %v316 = vsel %vm263, %v240, 0
        %v319 = vsel %vm263, %v241, 0
        %v322 = vsel %vm263, %v242, 0
        %v325 = vsel %vm263, %v243, 0
        %v328 = vsel %vm263, %v244, 0
        %v331 = vsel %vm263, %v245, 0
        %v334 = vsel %vm263, %v246, 0
        %v337 = vsel %vm263, %v247, 0
        %v340 = vsel %vm263, %v248, 0
        %v343 = vsel %vm263, %v249, 0
        %v346 = vsel %vm263, %v250, 0
        %v349 = vsel %vm263, %v251, 0
        %v352 = vsel %vm263, %v252, 0
        %v355 = vsel %vm263, %v253, 0
        %v358 = vsel %vm263, %v254, 0
        %360 = vmatpush.msra.mxu0 0.0
        %361 = vmatpush.msra.mxu0 0.0
        %362 = vmatpush.msra.mxu0 0.0
        %363 = vmatpush.msra.mxu0 0.0
        %364 = vmatpush.msra.mxu0 0.0
        %365 = vmatpush.msra.mxu0 0.0
        %366 = vmatpush.msra.mxu0 0.0
        %367 = vmatpush.msra.mxu0 0.0
        %368 = vmatpush.msra.mxu0 %v262
        %369 = vmatpush.msra.mxu0 %v261
        %370 = vmatpush.msra.mxu0 %v260
        %371 = vmatpush.msra.mxu0 %v259
        %372 = vmatpush.msra.mxu0 %v258
        %373 = vmatpush.msra.mxu0 %v257
        %374 = vmatpush.msra.mxu0 %v256
        %375 = vmatpush.msra.mxu0 %v255
        %376 = vmatmul.f32.gmra.mxu0 %v265
        %v377 = vpop.f32.mrf.mxu0
        %v378 = vadd.f32 0.0, %v377
        %379 = vmatmul.f32.gmra.mxu0 %v268
        %v380 = vpop.f32.mrf.mxu0
        %v381 = vadd.f32 0.0, %v380
        %382 = vmatmul.f32.gmra.mxu0 %v271
        %v383 = vpop.f32.mrf.mxu0
        %v384 = vadd.f32 0.0, %v383
        %385 = vmatmul.f32.gmra.mxu0 %v274
        %v386 = vpop.f32.mrf.mxu0
        %v387 = vadd.f32 0.0, %v386
        %388 = vmatmul.f32.gmra.mxu0 %v277
        %v389 = vpop.f32.mrf.mxu0
        %v390 = vadd.f32 0.0, %v389
        %391 = vmatmul.f32.gmra.mxu0 %v280
        %v392 = vpop.f32.mrf.mxu0
        %v393 = vadd.f32 0.0, %v392
        %394 = vmatmul.f32.gmra.mxu0 %v283
        %v395 = vpop.f32.mrf.mxu0
        %v396 = vadd.f32 0.0, %v395
        %397 = vmatmul.f32.gmra.mxu0 %v286
        %v398 = vpop.f32.mrf.mxu0
        %v399 = vadd.f32 0.0, %v398
        %400 = vmatmul.f32.gmra.mxu0 %v289
        %v401 = vpop.f32.mrf.mxu0
        %v402 = vadd.f32 0.0, %v401
        %403 = vmatmul.f32.gmra.mxu0 %v292
        %v404 = vpop.f32.mrf.mxu0
        %v405 = vadd.f32 0.0, %v404
        %406 = vmatmul.f32.gmra.mxu0 %v295
        %v407 = vpop.f32.mrf.mxu0
        %v408 = vadd.f32 0.0, %v407
        %409 = vmatmul.f32.gmra.mxu0 %v298
        %v410 = vpop.f32.mrf.mxu0
        %v411 = vadd.f32 0.0, %v410
        %412 = vmatmul.f32.gmra.mxu0 %v301
        %v413 = vpop.f32.mrf.mxu0
        %v414 = vadd.f32 0.0, %v413
        %415 = vmatmul.f32.gmra.mxu0 %v304
        %v416 = vpop.f32.mrf.mxu0
        %v417 = vadd.f32 0.0, %v416
        %418 = vmatmul.f32.gmra.mxu0 %v307
        %v419 = vpop.f32.mrf.mxu0
        %v420 = vadd.f32 0.0, %v419
        %421 = vmatmul.f32.gmra.mxu0 %v310
        %v422 = vpop.f32.mrf.mxu0
        %v423 = vadd.f32 0.0, %v422
        %424 = vmatmul.f32.gmra.mxu0 %v313
        %v425 = vpop.f32.mrf.mxu0
        %v426 = vadd.f32 0.0, %v425
        %427 = vmatmul.f32.gmra.mxu0 %v316
        %v428 = vpop.f32.mrf.mxu0
        %v429 = vadd.f32 0.0, %v428
        %430 = vmatmul.f32.gmra.mxu0 %v319
        %v431 = vpop.f32.mrf.mxu0
        %v432 = vadd.f32 0.0, %v431
        %433 = vmatmul.f32.gmra.mxu0 %v322
        %v434 = vpop.f32.mrf.mxu0
        %v435 = vadd.f32 0.0, %v434
        %436 = vmatmul.f32.gmra.mxu0 %v325
        %v437 = vpop.f32.mrf.mxu0
        %v438 = vadd.f32 0.0, %v437
        %439 = vmatmul.f32.gmra.mxu0 %v328
        %v440 = vpop.f32.mrf.mxu0
        %v441 = vadd.f32 0.0, %v440
        %442 = vmatmul.f32.gmra.mxu0 %v331
        %v443 = vpop.f32.mrf.mxu0
        %v444 = vadd.f32 0.0, %v443
        %445 = vmatmul.f32.gmra.mxu0 %v334
        %v446 = vpop.f32.mrf.mxu0
        %v447 = vadd.f32 0.0, %v446
        %448 = vmatmul.f32.gmra.mxu0 %v337
        %v449 = vpop.f32.mrf.mxu0
        %v450 = vadd.f32 0.0, %v449
        %451 = vmatmul.f32.gmra.mxu0 %v340
        %v452 = vpop.f32.mrf.mxu0
        %v453 = vadd.f32 0.0, %v452
        %454 = vmatmul.f32.gmra.mxu0 %v343
        %v455 = vpop.f32.mrf.mxu0
        %v456 = vadd.f32 0.0, %v455
        %457 = vmatmul.f32.gmra.mxu0 %v346
        %v458 = vpop.f32.mrf.mxu0
        %v459 = vadd.f32 0.0, %v458
        %460 = vmatmul.f32.gmra.mxu0 %v349
        %v461 = vpop.f32.mrf.mxu0
        %v462 = vadd.f32 0.0, %v461
        %463 = vmatmul.f32.gmra.mxu0 %v352
        %v464 = vpop.f32.mrf.mxu0
        %v465 = vadd.f32 0.0, %v464
        %466 = vmatmul.f32.gmra.mxu0 %v355
        %v467 = vpop.f32.mrf.mxu0
        %v468 = vadd.f32 0.0, %v467
        %469 = vmatmul.f32.gmra.mxu0 %v358
        %v470 = vpop.f32.mrf.mxu0
        %v471 = vadd.f32 0.0, %v470
        %472 = vdwg.mxu0
        %v473 = vld [vmem:[%s2] sm:$0xff]
        %v474 = vld [vmem:[%s2 + $0x8] sm:$0xff]
        %vm475 = vcmask 130048
        %v477 = vsel %vm475, %v378, 0
        %v480 = vsel %vm475, %v381, 0
        %v483 = vsel %vm475, %v384, 0
        %v486 = vsel %vm475, %v387, 0
        %v489 = vsel %vm475, %v390, 0
        %v492 = vsel %vm475, %v393, 0
        %v495 = vsel %vm475, %v396, 0
        %v498 = vsel %vm475, %v399, 0
        %v501 = vsel %vm475, %v402, 0
        %v504 = vsel %vm475, %v405, 0
        %v507 = vsel %vm475, %v408, 0
        %v510 = vsel %vm475, %v411, 0
        %v513 = vsel %vm475, %v414, 0
        %v516 = vsel %vm475, %v417, 0
        %v519 = vsel %vm475, %v420, 0
        %v522 = vsel %vm475, %v423, 0
        %v525 = vsel %vm475, %v426, 0
        %v528 = vsel %vm475, %v429, 0
        %v531 = vsel %vm475, %v432, 0
        %v534 = vsel %vm475, %v435, 0
        %v537 = vsel %vm475, %v438, 0
        %v540 = vsel %vm475, %v441, 0
        %v543 = vsel %vm475, %v444, 0
        %v546 = vsel %vm475, %v447, 0
        %v549 = vsel %vm475, %v450, 0
        %v552 = vsel %vm475, %v453, 0
        %v555 = vsel %vm475, %v456, 0
        %v558 = vsel %vm475, %v459, 0
        %v561 = vsel %vm475, %v462, 0
        %v564 = vsel %vm475, %v465, 0
        %v567 = vsel %vm475, %v468, 0
        %v570 = vsel %vm475, %v471, 0
        %572 = vmatpush.msra.mxu0 0.0
        %573 = vmatpush.msra.mxu0 0.0
        %574 = vmatpush.msra.mxu0 0.0
        %575 = vmatpush.msra.mxu0 0.0
        %576 = vmatpush.msra.mxu0 0.0
        %577 = vmatpush.msra.mxu0 0.0
        %578 = vmatpush.msra.mxu0 0.0
        %579 = vmatpush.msra.mxu0 0.0
        %580 = vmatpush.msra.mxu0 0.0
        %581 = vmatpush.msra.mxu0 0.0
        %582 = vmatpush.msra.mxu0 0.0
        %583 = vmatpush.msra.mxu0 0.0
        %584 = vmatpush.msra.mxu0 0.0
        %585 = vmatpush.msra.mxu0 0.0
        %586 = vmatpush.msra.mxu0 %v474
        %587 = vmatpush.msra.mxu0 %v473
        %588 = vmatmul.f32.gmra.mxu0 %v477
        %v589 = vpop.f32.mrf.mxu0
        %v590 = vadd.f32 0.0, %v589
        %591 = vmatmul.f32.gmra.mxu0 %v480
        %v592 = vpop.f32.mrf.mxu0
        %v593 = vadd.f32 0.0, %v592
        %594 = vmatmul.f32.gmra.mxu0 %v483
        %v595 = vpop.f32.mrf.mxu0
        %v596 = vadd.f32 0.0, %v595
        %597 = vmatmul.f32.gmra.mxu0 %v486
        %v598 = vpop.f32.mrf.mxu0
        %v599 = vadd.f32 0.0, %v598
        %600 = vmatmul.f32.gmra.mxu0 %v489
        %v601 = vpop.f32.mrf.mxu0
        %v602 = vadd.f32 0.0, %v601
        %603 = vmatmul.f32.gmra.mxu0 %v492
        %v604 = vpop.f32.mrf.mxu0
        %v605 = vadd.f32 0.0, %v604
        %606 = vmatmul.f32.gmra.mxu0 %v495
        %v607 = vpop.f32.mrf.mxu0
        %v608 = vadd.f32 0.0, %v607
        %609 = vmatmul.f32.gmra.mxu0 %v498
        %v610 = vpop.f32.mrf.mxu0
        %v611 = vadd.f32 0.0, %v610
        %612 = vmatmul.f32.gmra.mxu0 %v501
        %v613 = vpop.f32.mrf.mxu0
        %v614 = vadd.f32 0.0, %v613
        %615 = vmatmul.f32.gmra.mxu0 %v504
        %v616 = vpop.f32.mrf.mxu0
        %v617 = vadd.f32 0.0, %v616
        %618 = vmatmul.f32.gmra.mxu0 %v507
        %v619 = vpop.f32.mrf.mxu0
        %v620 = vadd.f32 0.0, %v619
        %621 = vmatmul.f32.gmra.mxu0 %v510
        %v622 = vpop.f32.mrf.mxu0
        %v623 = vadd.f32 0.0, %v622
        %624 = vmatmul.f32.gmra.mxu0 %v513
        %v625 = vpop.f32.mrf.mxu0
        %v626 = vadd.f32 0.0, %v625
        %627 = vmatmul.f32.gmra.mxu0 %v516
        %v628 = vpop.f32.mrf.mxu0
        %v629 = vadd.f32 0.0, %v628
        %630 = vmatmul.f32.gmra.mxu0 %v519
        %v631 = vpop.f32.mrf.mxu0
        %v632 = vadd.f32 0.0, %v631
        %633 = vmatmul.f32.gmra.mxu0 %v522
        %v634 = vpop.f32.mrf.mxu0
        %v635 = vadd.f32 0.0, %v634
        %636 = vmatmul.f32.gmra.mxu0 %v525
        %v637 = vpop.f32.mrf.mxu0
        %v638 = vadd.f32 0.0, %v637
        %639 = vmatmul.f32.gmra.mxu0 %v528
        %v640 = vpop.f32.mrf.mxu0
        %v641 = vadd.f32 0.0, %v640
        %642 = vmatmul.f32.gmra.mxu0 %v531
        %v643 = vpop.f32.mrf.mxu0
        %v644 = vadd.f32 0.0, %v643
        %645 = vmatmul.f32.gmra.mxu0 %v534
        %v646 = vpop.f32.mrf.mxu0
        %v647 = vadd.f32 0.0, %v646
        %648 = vmatmul.f32.gmra.mxu0 %v537
        %v649 = vpop.f32.mrf.mxu0
        %v650 = vadd.f32 0.0, %v649
        %651 = vmatmul.f32.gmra.mxu0 %v540
        %v652 = vpop.f32.mrf.mxu0
        %v653 = vadd.f32 0.0, %v652
        %654 = vmatmul.f32.gmra.mxu0 %v543
        %v655 = vpop.f32.mrf.mxu0
        %v656 = vadd.f32 0.0, %v655
        %657 = vmatmul.f32.gmra.mxu0 %v546
        %v658 = vpop.f32.mrf.mxu0
        %v659 = vadd.f32 0.0, %v658
        %660 = vmatmul.f32.gmra.mxu0 %v549
        %v661 = vpop.f32.mrf.mxu0
        %v662 = vadd.f32 0.0, %v661
        %663 = vmatmul.f32.gmra.mxu0 %v552
        %v664 = vpop.f32.mrf.mxu0
        %v665 = vadd.f32 0.0, %v664
        %666 = vmatmul.f32.gmra.mxu0 %v555
        %v667 = vpop.f32.mrf.mxu0
        %v668 = vadd.f32 0.0, %v667
        %669 = vmatmul.f32.gmra.mxu0 %v558
        %v670 = vpop.f32.mrf.mxu0
        %v671 = vadd.f32 0.0, %v670
        %672 = vmatmul.f32.gmra.mxu0 %v561
        %v673 = vpop.f32.mrf.mxu0
        %v674 = vadd.f32 0.0, %v673
        %675 = vmatmul.f32.gmra.mxu0 %v564
        %v676 = vpop.f32.mrf.mxu0
        %v677 = vadd.f32 0.0, %v676
        %678 = vmatmul.f32.gmra.mxu0 %v567
        %v679 = vpop.f32.mrf.mxu0
        %v680 = vadd.f32 0.0, %v679
        %681 = vmatmul.f32.gmra.mxu0 %v570
        %v682 = vpop.f32.mrf.mxu0
        %v683 = vadd.f32 0.0, %v682
        %684 = vdwg.mxu0
        %v685 = vmax.f32 %v590, 0.0
        %v686 = vmax.f32 %v593, 0.0
        %v687 = vmax.f32 %v596, 0.0
        %v688 = vmax.f32 %v599, 0.0
        %v689 = vmax.f32 %v602, 0.0
        %v690 = vmax.f32 %v605, 0.0
        %v691 = vmax.f32 %v608, 0.0
        %v692 = vmax.f32 %v611, 0.0
        %v693 = vmax.f32 %v614, 0.0
        %v694 = vmax.f32 %v617, 0.0
        %v695 = vmax.f32 %v620, 0.0
        %v696 = vmax.f32 %v623, 0.0
        %v697 = vmax.f32 %v626, 0.0
        %v698 = vmax.f32 %v629, 0.0
        %v699 = vmax.f32 %v632, 0.0
        %v700 = vmax.f32 %v635, 0.0
        %v701 = vmax.f32 %v638, 0.0
        %v702 = vmax.f32 %v641, 0.0
        %v703 = vmax.f32 %v644, 0.0
        %v704 = vmax.f32 %v647, 0.0
        %v705 = vmax.f32 %v650, 0.0
        %v706 = vmax.f32 %v653, 0.0
        %v707 = vmax.f32 %v656, 0.0
        %v708 = vmax.f32 %v659, 0.0
        %v709 = vmax.f32 %v662, 0.0
        %v710 = vmax.f32 %v665, 0.0
        %v711 = vmax.f32 %v668, 0.0
        %v712 = vmax.f32 %v671, 0.0
        %v713 = vmax.f32 %v674, 0.0
        %v714 = vmax.f32 %v677, 0.0
        %v715 = vmax.f32 %v680, 0.0
        %v716 = vmax.f32 %v683, 0.0
        %721 = vrot.lane.b32.xlu0 %v689, 64
        %v722 = vpop.permute.xlu0 %721
        %723 = vrot.lane.b32.xlu0 %v690, 64
        %v724 = vpop.permute.xlu0 %723
        %725 = vrot.lane.b32.xlu0 %v691, 64
        %v726 = vpop.permute.xlu0 %725
        %727 = vrot.lane.b32.xlu0 %v692, 64
        %v728 = vpop.permute.xlu0 %727
        %v733 = vsel %vm263, %v685, %v722
        %v734 = vsel %vm263, %v686, %v724
        %v735 = vsel %vm263, %v687, %v726
        %v736 = vsel %vm263, %v688, %v728
        %741 = vrot.lane.b32.xlu0 %v697, 64
        %v742 = vpop.permute.xlu0 %741
        %743 = vrot.lane.b32.xlu0 %v698, 64
        %v744 = vpop.permute.xlu0 %743
        %745 = vrot.lane.b32.xlu0 %v699, 64
        %v746 = vpop.permute.xlu0 %745
        %747 = vrot.lane.b32.xlu0 %v700, 64
        %v748 = vpop.permute.xlu0 %747
        %v753 = vsel %vm263, %v693, %v742
        %v754 = vsel %vm263, %v694, %v744
        %v755 = vsel %vm263, %v695, %v746
        %v756 = vsel %vm263, %v696, %v748
        %761 = vrot.lane.b32.xlu0 %v705, 64
        %v762 = vpop.permute.xlu0 %761
        %763 = vrot.lane.b32.xlu0 %v706, 64
        %v764 = vpop.permute.xlu0 %763
        %765 = vrot.lane.b32.xlu0 %v707, 64
        %v766 = vpop.permute.xlu0 %765
        %767 = vrot.lane.b32.xlu0 %v708, 64
        %v768 = vpop.permute.xlu0 %767
        %v773 = vsel %vm263, %v701, %v762
        %v774 = vsel %vm263, %v702, %v764
        %v775 = vsel %vm263, %v703, %v766
        %v776 = vsel %vm263, %v704, %v768
        %781 = vrot.lane.b32.xlu0 %v713, 64
        %v782 = vpop.permute.xlu0 %781
        %783 = vrot.lane.b32.xlu0 %v714, 64
        %v784 = vpop.permute.xlu0 %783
        %785 = vrot.lane.b32.xlu0 %v715, 64
        %v786 = vpop.permute.xlu0 %785
        %787 = vrot.lane.b32.xlu0 %v716, 64
        %v788 = vpop.permute.xlu0 %787
        %v793 = vsel %vm263, %v709, %v782
        %v794 = vsel %vm263, %v710, %v784
        %v795 = vsel %vm263, %v711, %v786
        %v796 = vsel %vm263, %v712, %v788
        %v797 = vld [vmem:[%s3] sm:$0xff]
        %v798 = vld [vmem:[%s4] sm:$0xff]
        %800 = vset.pattern.permute.xlu0 0
        %801 = vperm.xlu0 %800, %v798
        %v802 = vpop.permute.xlu0 %801
        %820 = vst [vmem:[#allocation1] ss:$9 sm:$0xff] %v733
        %s821 = scalar_lea.vmem [#allocation1], 1
        %822 = vst [vmem:[%s821] ss:$9 sm:$0xff] %v753
        %s823 = scalar_lea.vmem [#allocation1], 2
        %824 = vst [vmem:[%s823] ss:$9 sm:$0xff] %v773
        %s825 = scalar_lea.vmem [#allocation1], 3
        %826 = vst [vmem:[%s825] ss:$9 sm:$0xff] %v793
        %v827 = vld [vmem:[#allocation1] sm:$0xff]
        %v828 = vld [vmem:[#allocation1 + $0x9] sm:$0xff]
        %v829 = vld [vmem:[#allocation1 + $0x12] sm:$0xff]
        %v830 = vld [vmem:[#allocation1 + $0x1b] sm:$0xff]
        %v831 = vld [vmem:[#allocation1 + $0x24] sm:$0xff]
        %v832 = vld [vmem:[#allocation1 + $0x2d] sm:$0xff]
        %v833 = vld [vmem:[#allocation1 + $0x36] sm:$0xff]
        %v834 = vld [vmem:[#allocation1 + $0x3f] sm:$0xff]
        %835 = vst [vmem:[#allocation1] ss:$9 sm:$0xff] %v734
        %836 = vst [vmem:[%s821] ss:$9 sm:$0xff] %v754
        %837 = vst [vmem:[%s823] ss:$9 sm:$0xff] %v774
        %838 = vst [vmem:[%s825] ss:$9 sm:$0xff] %v794
        %v839 = vld [vmem:[#allocation1] sm:$0xff]
        %v840 = vld [vmem:[#allocation1 + $0x9] sm:$0xff]
        %v841 = vld [vmem:[#allocation1 + $0x12] sm:$0xff]
        %v842 = vld [vmem:[#allocation1 + $0x1b] sm:$0xff]
        %v843 = vld [vmem:[#allocation1 + $0x24] sm:$0xff]
        %v844 = vld [vmem:[#allocation1 + $0x2d] sm:$0xff]
        %v845 = vld [vmem:[#allocation1 + $0x36] sm:$0xff]
        %v846 = vld [vmem:[#allocation1 + $0x3f] sm:$0xff]
        %847 = vst [vmem:[#allocation1] ss:$9 sm:$0xff] %v735
        %848 = vst [vmem:[%s821] ss:$9 sm:$0xff] %v755
        %849 = vst [vmem:[%s823] ss:$9 sm:$0xff] %v775
        %850 = vst [vmem:[%s825] ss:$9 sm:$0xff] %v795
        %v851 = vld [vmem:[#allocation1] sm:$0xff]
        %v852 = vld [vmem:[#allocation1 + $0x9] sm:$0xff]
        %v853 = vld [vmem:[#allocation1 + $0x12] sm:$0xff]
        %v854 = vld [vmem:[#allocation1 + $0x1b] sm:$0xff]
        %v855 = vld [vmem:[#allocation1 + $0x24] sm:$0xff]
        %v856 = vld [vmem:[#allocation1 + $0x2d] sm:$0xff]
        %v857 = vld [vmem:[#allocation1 + $0x36] sm:$0xff]
        %v858 = vld [vmem:[#allocation1 + $0x3f] sm:$0xff]
        %859 = vst [vmem:[#allocation1] ss:$9 sm:$0xff] %v736
        %860 = vst [vmem:[%s821] ss:$9 sm:$0xff] %v756
        %861 = vst [vmem:[%s823] ss:$9 sm:$0xff] %v776
        %862 = vst [vmem:[%s825] ss:$9 sm:$0xff] %v796
        %v863 = vld [vmem:[#allocation1] sm:$0xff]
        %v864 = vld [vmem:[#allocation1 + $0x9] sm:$0xff]
        %v865 = vld [vmem:[#allocation1 + $0x12] sm:$0xff]
        %v866 = vld [vmem:[#allocation1 + $0x1b] sm:$0xff]
        %v867 = vld [vmem:[#allocation1 + $0x24] sm:$0xff]
        %v868 = vld [vmem:[#allocation1 + $0x2d] sm:$0xff]
        %v869 = vld [vmem:[#allocation1 + $0x36] sm:$0xff]
        %v870 = vld [vmem:[#allocation1 + $0x3f] sm:$0xff]
        %vm871 = vcmask 31744
        %v873 = vsel %vm871, %v797, 0
        %vm875 = vcmask 1043456
        %v876 = vsel %vm875, %v827, 0
        %v878 = vsel %vm875, %v828, 0
        %v880 = vsel %vm875, %v829, 0
        %v882 = vsel %vm875, %v830, 0
        %v884 = vsel %vm875, %v831, 0
        %v886 = vsel %vm875, %v832, 0
        %v888 = vsel %vm875, %v833, 0
        %v890 = vsel %vm875, %v834, 0
        %v892 = vsel %vm875, %v839, 0
        %v894 = vsel %vm875, %v840, 0
        %v896 = vsel %vm875, %v841, 0
        %v898 = vsel %vm875, %v842, 0
        %v900 = vsel %vm875, %v843, 0
        %v902 = vsel %vm875, %v844, 0
        %v904 = vsel %vm875, %v845, 0
        %v906 = vsel %vm875, %v846, 0
        %v908 = vsel %vm875, %v851, 0
        %v910 = vsel %vm875, %v852, 0
        %v912 = vsel %vm875, %v853, 0
        %v914 = vsel %vm875, %v854, 0
        %v916 = vsel %vm875, %v855, 0
        %v918 = vsel %vm875, %v856, 0
        %v920 = vsel %vm875, %v857, 0
        %v922 = vsel %vm875, %v858, 0
        %v924 = vsel %vm875, %v863, 0
        %v926 = vsel %vm875, %v864, 0
        %v928 = vsel %vm875, %v865, 0
        %v930 = vsel %vm875, %v866, 0
        %v932 = vsel %vm875, %v867, 0
        %v934 = vsel %vm875, %v868, 0
        %v936 = vsel %vm875, %v869, 0
        %v938 = vsel %vm875, %v870, 0
        %940 = vmatpush.msra.mxu0 0.0
        %941 = vmatpush.msra.mxu0 0.0
        %942 = vmatpush.msra.mxu0 0.0
        %943 = vmatpush.msra.mxu0 0.0
        %944 = vmatpush.msra.mxu0 0.0
        %945 = vmatpush.msra.mxu0 0.0
        %946 = vmatpush.msra.mxu0 0.0
        %947 = vmatpush.msra.mxu0 0.0
        %948 = vmatpush.msra.mxu0 0.0
        %949 = vmatpush.msra.mxu0 0.0
        %950 = vmatpush.msra.mxu0 0.0
        %951 = vmatpush.msra.mxu0 0.0
        %952 = vmatpush.msra.mxu0 0.0
        %953 = vmatpush.msra.mxu0 0.0
        %954 = vmatpush.msra.mxu0 0.0
        %955 = vmatpush.msra.mxu0 %v876
        %956 = vmatmul.f32.gmra.mxu0 %v873
        %v957 = vpop.f32.mrf.mxu0
        %v958 = vadd.f32 %v802, %v957
        %959 = vdwg.mxu0
        %960 = vmatpush.msra.mxu0 0.0
        %961 = vmatpush.msra.mxu0 0.0
        %962 = vmatpush.msra.mxu0 0.0
        %963 = vmatpush.msra.mxu0 0.0
        %964 = vmatpush.msra.mxu0 0.0
        %965 = vmatpush.msra.mxu0 0.0
        %966 = vmatpush.msra.mxu0 0.0
        %967 = vmatpush.msra.mxu0 0.0
        %968 = vmatpush.msra.mxu0 0.0
        %969 = vmatpush.msra.mxu0 0.0
        %970 = vmatpush.msra.mxu0 0.0
        %971 = vmatpush.msra.mxu0 0.0
        %972 = vmatpush.msra.mxu0 0.0
        %973 = vmatpush.msra.mxu0 0.0
        %974 = vmatpush.msra.mxu0 0.0
        %975 = vmatpush.msra.mxu0 %v878
        %976 = vmatmul.f32.gmra.mxu0 %v873
        %v977 = vpop.f32.mrf.mxu0
        %v978 = vadd.f32 %v802, %v977
        %979 = vdwg.mxu0
        %980 = vmatpush.msra.mxu0 0.0
        %981 = vmatpush.msra.mxu0 0.0
        %982 = vmatpush.msra.mxu0 0.0
        %983 = vmatpush.msra.mxu0 0.0
        %984 = vmatpush.msra.mxu0 0.0
        %985 = vmatpush.msra.mxu0 0.0
        %986 = vmatpush.msra.mxu0 0.0
        %987 = vmatpush.msra.mxu0 0.0
        %988 = vmatpush.msra.mxu0 0.0
        %989 = vmatpush.msra.mxu0 0.0
        %990 = vmatpush.msra.mxu0 0.0
        %991 = vmatpush.msra.mxu0 0.0
        %992 = vmatpush.msra.mxu0 0.0
        %993 = vmatpush.msra.mxu0 0.0
        %994 = vmatpush.msra.mxu0 0.0
        %995 = vmatpush.msra.mxu0 %v880
        %996 = vmatmul.f32.gmra.mxu0 %v873
        %v997 = vpop.f32.mrf.mxu0
        %v998 = vadd.f32 %v802, %v997
        %999 = vdwg.mxu0
        %1000 = vmatpush.msra.mxu0 0.0
        %1001 = vmatpush.msra.mxu0 0.0
        %1002 = vmatpush.msra.mxu0 0.0
        %1003 = vmatpush.msra.mxu0 0.0
        %1004 = vmatpush.msra.mxu0 0.0
        %1005 = vmatpush.msra.mxu0 0.0
        %1006 = vmatpush.msra.mxu0 0.0
        %1007 = vmatpush.msra.mxu0 0.0
        %1008 = vmatpush.msra.mxu0 0.0
        %1009 = vmatpush.msra.mxu0 0.0
        %1010 = vmatpush.msra.mxu0 0.0
        %1011 = vmatpush.msra.mxu0 0.0
        %1012 = vmatpush.msra.mxu0 0.0
        %1013 = vmatpush.msra.mxu0 0.0
        %1014 = vmatpush.msra.mxu0 0.0
        %1015 = vmatpush.msra.mxu0 %v882
        %1016 = vmatmul.f32.gmra.mxu0 %v873
        %v1017 = vpop.f32.mrf.mxu0
        %v1018 = vadd.f32 %v802, %v1017
        %1019 = vdwg.mxu0
        %1020 = vmatpush.msra.mxu0 0.0
        %1021 = vmatpush.msra.mxu0 0.0
        %1022 = vmatpush.msra.mxu0 0.0
        %1023 = vmatpush.msra.mxu0 0.0
        %1024 = vmatpush.msra.mxu0 0.0
        %1025 = vmatpush.msra.mxu0 0.0
        %1026 = vmatpush.msra.mxu0 0.0
        %1027 = vmatpush.msra.mxu0 0.0
        %1028 = vmatpush.msra.mxu0 0.0
        %1029 = vmatpush.msra.mxu0 0.0
        %1030 = vmatpush.msra.mxu0 0.0
        %1031 = vmatpush.msra.mxu0 0.0
        %1032 = vmatpush.msra.mxu0 0.0
        %1033 = vmatpush.msra.mxu0 0.0
        %1034 = vmatpush.msra.mxu0 0.0
        %1035 = vmatpush.msra.mxu0 %v884
        %1036 = vmatmul.f32.gmra.mxu0 %v873
        %v1037 = vpop.f32.mrf.mxu0
        %v1038 = vadd.f32 %v802, %v1037
        %1039 = vdwg.mxu0
        %1040 = vmatpush.msra.mxu0 0.0
        %1041 = vmatpush.msra.mxu0 0.0
        %1042 = vmatpush.msra.mxu0 0.0
        %1043 = vmatpush.msra.mxu0 0.0
        %1044 = vmatpush.msra.mxu0 0.0
        %1045 = vmatpush.msra.mxu0 0.0
        %1046 = vmatpush.msra.mxu0 0.0
        %1047 = vmatpush.msra.mxu0 0.0
        %1048 = vmatpush.msra.mxu0 0.0
        %1049 = vmatpush.msra.mxu0 0.0
        %1050 = vmatpush.msra.mxu0 0.0
        %1051 = vmatpush.msra.mxu0 0.0
        %1052 = vmatpush.msra.mxu0 0.0
        %1053 = vmatpush.msra.mxu0 0.0
        %1054 = vmatpush.msra.mxu0 0.0
        %1055 = vmatpush.msra.mxu0 %v886
        %1056 = vmatmul.f32.gmra.mxu0 %v873
        %v1057 = vpop.f32.mrf.mxu0
        %v1058 = vadd.f32 %v802, %v1057
        %1059 = vdwg.mxu0
        %1060 = vmatpush.msra.mxu0 0.0
        %1061 = vmatpush.msra.mxu0 0.0
        %1062 = vmatpush.msra.mxu0 0.0
        %1063 = vmatpush.msra.mxu0 0.0
        %1064 = vmatpush.msra.mxu0 0.0
        %1065 = vmatpush.msra.mxu0 0.0
        %1066 = vmatpush.msra.mxu0 0.0
        %1067 = vmatpush.msra.mxu0 0.0
        %1068 = vmatpush.msra.mxu0 0.0
        %1069 = vmatpush.msra.mxu0 0.0
        %1070 = vmatpush.msra.mxu0 0.0
        %1071 = vmatpush.msra.mxu0 0.0
        %1072 = vmatpush.msra.mxu0 0.0
        %1073 = vmatpush.msra.mxu0 0.0
        %1074 = vmatpush.msra.mxu0 0.0
        %1075 = vmatpush.msra.mxu0 %v888
        %1076 = vmatmul.f32.gmra.mxu0 %v873
        %v1077 = vpop.f32.mrf.mxu0
        %v1078 = vadd.f32 %v802, %v1077
        %1079 = vdwg.mxu0
        %1080 = vmatpush.msra.mxu0 0.0
        %1081 = vmatpush.msra.mxu0 0.0
        %1082 = vmatpush.msra.mxu0 0.0
        %1083 = vmatpush.msra.mxu0 0.0
        %1084 = vmatpush.msra.mxu0 0.0
        %1085 = vmatpush.msra.mxu0 0.0
        %1086 = vmatpush.msra.mxu0 0.0
        %1087 = vmatpush.msra.mxu0 0.0
        %1088 = vmatpush.msra.mxu0 0.0
        %1089 = vmatpush.msra.mxu0 0.0
        %1090 = vmatpush.msra.mxu0 0.0
        %1091 = vmatpush.msra.mxu0 0.0
        %1092 = vmatpush.msra.mxu0 0.0
        %1093 = vmatpush.msra.mxu0 0.0
        %1094 = vmatpush.msra.mxu0 0.0
        %1095 = vmatpush.msra.mxu0 %v890
        %1096 = vmatmul.f32.gmra.mxu0 %v873
        %v1097 = vpop.f32.mrf.mxu0
        %v1098 = vadd.f32 %v802, %v1097
        %1099 = vdwg.mxu0
        %1100 = vmatpush.msra.mxu0 0.0
        %1101 = vmatpush.msra.mxu0 0.0
        %1102 = vmatpush.msra.mxu0 0.0
        %1103 = vmatpush.msra.mxu0 0.0
        %1104 = vmatpush.msra.mxu0 0.0
        %1105 = vmatpush.msra.mxu0 0.0
        %1106 = vmatpush.msra.mxu0 0.0
        %1107 = vmatpush.msra.mxu0 0.0
        %1108 = vmatpush.msra.mxu0 0.0
        %1109 = vmatpush.msra.mxu0 0.0
        %1110 = vmatpush.msra.mxu0 0.0
        %1111 = vmatpush.msra.mxu0 0.0
        %1112 = vmatpush.msra.mxu0 0.0
        %1113 = vmatpush.msra.mxu0 0.0
        %1114 = vmatpush.msra.mxu0 0.0
        %1115 = vmatpush.msra.mxu0 %v892
        %1116 = vmatmul.f32.gmra.mxu0 %v873
        %v1117 = vpop.f32.mrf.mxu0
        %v1118 = vadd.f32 %v802, %v1117
        %1119 = vdwg.mxu0
        %1120 = vmatpush.msra.mxu0 0.0
        %1121 = vmatpush.msra.mxu0 0.0
        %1122 = vmatpush.msra.mxu0 0.0
        %1123 = vmatpush.msra.mxu0 0.0
        %1124 = vmatpush.msra.mxu0 0.0
        %1125 = vmatpush.msra.mxu0 0.0
        %1126 = vmatpush.msra.mxu0 0.0
        %1127 = vmatpush.msra.mxu0 0.0
        %1128 = vmatpush.msra.mxu0 0.0
        %1129 = vmatpush.msra.mxu0 0.0
        %1130 = vmatpush.msra.mxu0 0.0
        %1131 = vmatpush.msra.mxu0 0.0
        %1132 = vmatpush.msra.mxu0 0.0
        %1133 = vmatpush.msra.mxu0 0.0
        %1134 = vmatpush.msra.mxu0 0.0
        %1135 = vmatpush.msra.mxu0 %v894
        %1136 = vmatmul.f32.gmra.mxu0 %v873
        %v1137 = vpop.f32.mrf.mxu0
        %v1138 = vadd.f32 %v802, %v1137
        %1139 = vdwg.mxu0
        %1140 = vmatpush.msra.mxu0 0.0
        %1141 = vmatpush.msra.mxu0 0.0
        %1142 = vmatpush.msra.mxu0 0.0
        %1143 = vmatpush.msra.mxu0 0.0
        %1144 = vmatpush.msra.mxu0 0.0
        %1145 = vmatpush.msra.mxu0 0.0
        %1146 = vmatpush.msra.mxu0 0.0
        %1147 = vmatpush.msra.mxu0 0.0
        %1148 = vmatpush.msra.mxu0 0.0
        %1149 = vmatpush.msra.mxu0 0.0
        %1150 = vmatpush.msra.mxu0 0.0
        %1151 = vmatpush.msra.mxu0 0.0
        %1152 = vmatpush.msra.mxu0 0.0
        %1153 = vmatpush.msra.mxu0 0.0
        %1154 = vmatpush.msra.mxu0 0.0
        %1155 = vmatpush.msra.mxu0 %v896
        %1156 = vmatmul.f32.gmra.mxu0 %v873
        %v1157 = vpop.f32.mrf.mxu0
        %v1158 = vadd.f32 %v802, %v1157
        %1159 = vdwg.mxu0
        %1160 = vmatpush.msra.mxu0 0.0
        %1161 = vmatpush.msra.mxu0 0.0
        %1162 = vmatpush.msra.mxu0 0.0
        %1163 = vmatpush.msra.mxu0 0.0
        %1164 = vmatpush.msra.mxu0 0.0
        %1165 = vmatpush.msra.mxu0 0.0
        %1166 = vmatpush.msra.mxu0 0.0
        %1167 = vmatpush.msra.mxu0 0.0
        %1168 = vmatpush.msra.mxu0 0.0
        %1169 = vmatpush.msra.mxu0 0.0
        %1170 = vmatpush.msra.mxu0 0.0
        %1171 = vmatpush.msra.mxu0 0.0
        %1172 = vmatpush.msra.mxu0 0.0
        %1173 = vmatpush.msra.mxu0 0.0
        %1174 = vmatpush.msra.mxu0 0.0
        %1175 = vmatpush.msra.mxu0 %v898
        %1176 = vmatmul.f32.gmra.mxu0 %v873
        %v1177 = vpop.f32.mrf.mxu0
        %v1178 = vadd.f32 %v802, %v1177
        %1179 = vdwg.mxu0
        %1180 = vmatpush.msra.mxu0 0.0
        %1181 = vmatpush.msra.mxu0 0.0
        %1182 = vmatpush.msra.mxu0 0.0
        %1183 = vmatpush.msra.mxu0 0.0
        %1184 = vmatpush.msra.mxu0 0.0
        %1185 = vmatpush.msra.mxu0 0.0
        %1186 = vmatpush.msra.mxu0 0.0
        %1187 = vmatpush.msra.mxu0 0.0
        %1188 = vmatpush.msra.mxu0 0.0
        %1189 = vmatpush.msra.mxu0 0.0
        %1190 = vmatpush.msra.mxu0 0.0
        %1191 = vmatpush.msra.mxu0 0.0
        %1192 = vmatpush.msra.mxu0 0.0
        %1193 = vmatpush.msra.mxu0 0.0
        %1194 = vmatpush.msra.mxu0 0.0
        %1195 = vmatpush.msra.mxu0 %v900
        %1196 = vmatmul.f32.gmra.mxu0 %v873
        %v1197 = vpop.f32.mrf.mxu0
        %v1198 = vadd.f32 %v802, %v1197
        %1199 = vdwg.mxu0
        %1200 = vmatpush.msra.mxu0 0.0
        %1201 = vmatpush.msra.mxu0 0.0
        %1202 = vmatpush.msra.mxu0 0.0
        %1203 = vmatpush.msra.mxu0 0.0
        %1204 = vmatpush.msra.mxu0 0.0
        %1205 = vmatpush.msra.mxu0 0.0
        %1206 = vmatpush.msra.mxu0 0.0
        %1207 = vmatpush.msra.mxu0 0.0
        %1208 = vmatpush.msra.mxu0 0.0
        %1209 = vmatpush.msra.mxu0 0.0
        %1210 = vmatpush.msra.mxu0 0.0
        %1211 = vmatpush.msra.mxu0 0.0
        %1212 = vmatpush.msra.mxu0 0.0
        %1213 = vmatpush.msra.mxu0 0.0
        %1214 = vmatpush.msra.mxu0 0.0
        %1215 = vmatpush.msra.mxu0 %v902
        %1216 = vmatmul.f32.gmra.mxu0 %v873
        %v1217 = vpop.f32.mrf.mxu0
        %v1218 = vadd.f32 %v802, %v1217
        %1219 = vdwg.mxu0
        %1220 = vmatpush.msra.mxu0 0.0
        %1221 = vmatpush.msra.mxu0 0.0
        %1222 = vmatpush.msra.mxu0 0.0
        %1223 = vmatpush.msra.mxu0 0.0
        %1224 = vmatpush.msra.mxu0 0.0
        %1225 = vmatpush.msra.mxu0 0.0
        %1226 = vmatpush.msra.mxu0 0.0
        %1227 = vmatpush.msra.mxu0 0.0
        %1228 = vmatpush.msra.mxu0 0.0
        %1229 = vmatpush.msra.mxu0 0.0
        %1230 = vmatpush.msra.mxu0 0.0
        %1231 = vmatpush.msra.mxu0 0.0
        %1232 = vmatpush.msra.mxu0 0.0
        %1233 = vmatpush.msra.mxu0 0.0
        %1234 = vmatpush.msra.mxu0 0.0
        %1235 = vmatpush.msra.mxu0 %v904
        %1236 = vmatmul.f32.gmra.mxu0 %v873
        %v1237 = vpop.f32.mrf.mxu0
        %v1238 = vadd.f32 %v802, %v1237
        %1239 = vdwg.mxu0
        %1240 = vmatpush.msra.mxu0 0.0
        %1241 = vmatpush.msra.mxu0 0.0
        %1242 = vmatpush.msra.mxu0 0.0
        %1243 = vmatpush.msra.mxu0 0.0
        %1244 = vmatpush.msra.mxu0 0.0
        %1245 = vmatpush.msra.mxu0 0.0
        %1246 = vmatpush.msra.mxu0 0.0
        %1247 = vmatpush.msra.mxu0 0.0
        %1248 = vmatpush.msra.mxu0 0.0
        %1249 = vmatpush.msra.mxu0 0.0
        %1250 = vmatpush.msra.mxu0 0.0
        %1251 = vmatpush.msra.mxu0 0.0
        %1252 = vmatpush.msra.mxu0 0.0
        %1253 = vmatpush.msra.mxu0 0.0
        %1254 = vmatpush.msra.mxu0 0.0
        %1255 = vmatpush.msra.mxu0 %v906
        %1256 = vmatmul.f32.gmra.mxu0 %v873
        %v1257 = vpop.f32.mrf.mxu0
        %v1258 = vadd.f32 %v802, %v1257
        %1259 = vdwg.mxu0
        %1260 = vmatpush.msra.mxu0 0.0
        %1261 = vmatpush.msra.mxu0 0.0
        %1262 = vmatpush.msra.mxu0 0.0
        %1263 = vmatpush.msra.mxu0 0.0
        %1264 = vmatpush.msra.mxu0 0.0
        %1265 = vmatpush.msra.mxu0 0.0
        %1266 = vmatpush.msra.mxu0 0.0
        %1267 = vmatpush.msra.mxu0 0.0
        %1268 = vmatpush.msra.mxu0 0.0
        %1269 = vmatpush.msra.mxu0 0.0
        %1270 = vmatpush.msra.mxu0 0.0
        %1271 = vmatpush.msra.mxu0 0.0
        %1272 = vmatpush.msra.mxu0 0.0
        %1273 = vmatpush.msra.mxu0 0.0
        %1274 = vmatpush.msra.mxu0 0.0
        %1275 = vmatpush.msra.mxu0 %v908
        %1276 = vmatmul.f32.gmra.mxu0 %v873
        %v1277 = vpop.f32.mrf.mxu0
        %v1278 = vadd.f32 %v802, %v1277
        %1279 = vdwg.mxu0
        %1280 = vmatpush.msra.mxu0 0.0
        %1281 = vmatpush.msra.mxu0 0.0
        %1282 = vmatpush.msra.mxu0 0.0
        %1283 = vmatpush.msra.mxu0 0.0
        %1284 = vmatpush.msra.mxu0 0.0
        %1285 = vmatpush.msra.mxu0 0.0
        %1286 = vmatpush.msra.mxu0 0.0
        %1287 = vmatpush.msra.mxu0 0.0
        %1288 = vmatpush.msra.mxu0 0.0
        %1289 = vmatpush.msra.mxu0 0.0
        %1290 = vmatpush.msra.mxu0 0.0
        %1291 = vmatpush.msra.mxu0 0.0
        %1292 = vmatpush.msra.mxu0 0.0
        %1293 = vmatpush.msra.mxu0 0.0
        %1294 = vmatpush.msra.mxu0 0.0
        %1295 = vmatpush.msra.mxu0 %v910
        %1296 = vmatmul.f32.gmra.mxu0 %v873
        %v1297 = vpop.f32.mrf.mxu0
        %v1298 = vadd.f32 %v802, %v1297
        %1299 = vdwg.mxu0
        %1300 = vmatpush.msra.mxu0 0.0
        %1301 = vmatpush.msra.mxu0 0.0
        %1302 = vmatpush.msra.mxu0 0.0
        %1303 = vmatpush.msra.mxu0 0.0
        %1304 = vmatpush.msra.mxu0 0.0
        %1305 = vmatpush.msra.mxu0 0.0
        %1306 = vmatpush.msra.mxu0 0.0
        %1307 = vmatpush.msra.mxu0 0.0
        %1308 = vmatpush.msra.mxu0 0.0
        %1309 = vmatpush.msra.mxu0 0.0
        %1310 = vmatpush.msra.mxu0 0.0
        %1311 = vmatpush.msra.mxu0 0.0
        %1312 = vmatpush.msra.mxu0 0.0
        %1313 = vmatpush.msra.mxu0 0.0
        %1314 = vmatpush.msra.mxu0 0.0
        %1315 = vmatpush.msra.mxu0 %v912
        %1316 = vmatmul.f32.gmra.mxu0 %v873
        %v1317 = vpop.f32.mrf.mxu0
        %v1318 = vadd.f32 %v802, %v1317
        %1319 = vdwg.mxu0
        %1320 = vmatpush.msra.mxu0 0.0
        %1321 = vmatpush.msra.mxu0 0.0
        %1322 = vmatpush.msra.mxu0 0.0
        %1323 = vmatpush.msra.mxu0 0.0
        %1324 = vmatpush.msra.mxu0 0.0
        %1325 = vmatpush.msra.mxu0 0.0
        %1326 = vmatpush.msra.mxu0 0.0
        %1327 = vmatpush.msra.mxu0 0.0
        %1328 = vmatpush.msra.mxu0 0.0
        %1329 = vmatpush.msra.mxu0 0.0
        %1330 = vmatpush.msra.mxu0 0.0
        %1331 = vmatpush.msra.mxu0 0.0
        %1332 = vmatpush.msra.mxu0 0.0
        %1333 = vmatpush.msra.mxu0 0.0
        %1334 = vmatpush.msra.mxu0 0.0
        %1335 = vmatpush.msra.mxu0 %v914
        %1336 = vmatmul.f32.gmra.mxu0 %v873
        %v1337 = vpop.f32.mrf.mxu0
        %v1338 = vadd.f32 %v802, %v1337
        %1339 = vdwg.mxu0
        %1340 = vmatpush.msra.mxu0 0.0
        %1341 = vmatpush.msra.mxu0 0.0
        %1342 = vmatpush.msra.mxu0 0.0
        %1343 = vmatpush.msra.mxu0 0.0
        %1344 = vmatpush.msra.mxu0 0.0
        %1345 = vmatpush.msra.mxu0 0.0
        %1346 = vmatpush.msra.mxu0 0.0
        %1347 = vmatpush.msra.mxu0 0.0
        %1348 = vmatpush.msra.mxu0 0.0
        %1349 = vmatpush.msra.mxu0 0.0
        %1350 = vmatpush.msra.mxu0 0.0
        %1351 = vmatpush.msra.mxu0 0.0
        %1352 = vmatpush.msra.mxu0 0.0
        %1353 = vmatpush.msra.mxu0 0.0
        %1354 = vmatpush.msra.mxu0 0.0
        %1355 = vmatpush.msra.mxu0 %v916
        %1356 = vmatmul.f32.gmra.mxu0 %v873
        %v1357 = vpop.f32.mrf.mxu0
        %v1358 = vadd.f32 %v802, %v1357
        %1359 = vdwg.mxu0
        %1360 = vmatpush.msra.mxu0 0.0
        %1361 = vmatpush.msra.mxu0 0.0
        %1362 = vmatpush.msra.mxu0 0.0
        %1363 = vmatpush.msra.mxu0 0.0
        %1364 = vmatpush.msra.mxu0 0.0
        %1365 = vmatpush.msra.mxu0 0.0
        %1366 = vmatpush.msra.mxu0 0.0
        %1367 = vmatpush.msra.mxu0 0.0
        %1368 = vmatpush.msra.mxu0 0.0
        %1369 = vmatpush.msra.mxu0 0.0
        %1370 = vmatpush.msra.mxu0 0.0
        %1371 = vmatpush.msra.mxu0 0.0
        %1372 = vmatpush.msra.mxu0 0.0
        %1373 = vmatpush.msra.mxu0 0.0
        %1374 = vmatpush.msra.mxu0 0.0
        %1375 = vmatpush.msra.mxu0 %v918
        %1376 = vmatmul.f32.gmra.mxu0 %v873
        %v1377 = vpop.f32.mrf.mxu0
        %v1378 = vadd.f32 %v802, %v1377
        %1379 = vdwg.mxu0
        %1380 = vmatpush.msra.mxu0 0.0
        %1381 = vmatpush.msra.mxu0 0.0
        %1382 = vmatpush.msra.mxu0 0.0
        %1383 = vmatpush.msra.mxu0 0.0
        %1384 = vmatpush.msra.mxu0 0.0
        %1385 = vmatpush.msra.mxu0 0.0
        %1386 = vmatpush.msra.mxu0 0.0
        %1387 = vmatpush.msra.mxu0 0.0
        %1388 = vmatpush.msra.mxu0 0.0
        %1389 = vmatpush.msra.mxu0 0.0
        %1390 = vmatpush.msra.mxu0 0.0
        %1391 = vmatpush.msra.mxu0 0.0
        %1392 = vmatpush.msra.mxu0 0.0
        %1393 = vmatpush.msra.mxu0 0.0
        %1394 = vmatpush.msra.mxu0 0.0
        %1395 = vmatpush.msra.mxu0 %v920
        %1396 = vmatmul.f32.gmra.mxu0 %v873
        %v1397 = vpop.f32.mrf.mxu0
        %v1398 = vadd.f32 %v802, %v1397
        %1399 = vdwg.mxu0
        %1400 = vmatpush.msra.mxu0 0.0
        %1401 = vmatpush.msra.mxu0 0.0
        %1402 = vmatpush.msra.mxu0 0.0
        %1403 = vmatpush.msra.mxu0 0.0
        %1404 = vmatpush.msra.mxu0 0.0
        %1405 = vmatpush.msra.mxu0 0.0
        %1406 = vmatpush.msra.mxu0 0.0
        %1407 = vmatpush.msra.mxu0 0.0
        %1408 = vmatpush.msra.mxu0 0.0
        %1409 = vmatpush.msra.mxu0 0.0
        %1410 = vmatpush.msra.mxu0 0.0
        %1411 = vmatpush.msra.mxu0 0.0
        %1412 = vmatpush.msra.mxu0 0.0
        %1413 = vmatpush.msra.mxu0 0.0
        %1414 = vmatpush.msra.mxu0 0.0
        %1415 = vmatpush.msra.mxu0 %v922
        %1416 = vmatmul.f32.gmra.mxu0 %v873
        %v1417 = vpop.f32.mrf.mxu0
        %v1418 = vadd.f32 %v802, %v1417
        %1419 = vdwg.mxu0
        %1420 = vmatpush.msra.mxu0 0.0
        %1421 = vmatpush.msra.mxu0 0.0
        %1422 = vmatpush.msra.mxu0 0.0
        %1423 = vmatpush.msra.mxu0 0.0
        %1424 = vmatpush.msra.mxu0 0.0
        %1425 = vmatpush.msra.mxu0 0.0
        %1426 = vmatpush.msra.mxu0 0.0
        %1427 = vmatpush.msra.mxu0 0.0
        %1428 = vmatpush.msra.mxu0 0.0
        %1429 = vmatpush.msra.mxu0 0.0
        %1430 = vmatpush.msra.mxu0 0.0
        %1431 = vmatpush.msra.mxu0 0.0
        %1432 = vmatpush.msra.mxu0 0.0
        %1433 = vmatpush.msra.mxu0 0.0
        %1434 = vmatpush.msra.mxu0 0.0
        %1435 = vmatpush.msra.mxu0 %v924
        %1436 = vmatmul.f32.gmra.mxu0 %v873
        %v1437 = vpop.f32.mrf.mxu0
        %v1438 = vadd.f32 %v802, %v1437
        %1439 = vdwg.mxu0
        %1440 = vmatpush.msra.mxu0 0.0
        %1441 = vmatpush.msra.mxu0 0.0
        %1442 = vmatpush.msra.mxu0 0.0
        %1443 = vmatpush.msra.mxu0 0.0
        %1444 = vmatpush.msra.mxu0 0.0
        %1445 = vmatpush.msra.mxu0 0.0
        %1446 = vmatpush.msra.mxu0 0.0
        %1447 = vmatpush.msra.mxu0 0.0
        %1448 = vmatpush.msra.mxu0 0.0
        %1449 = vmatpush.msra.mxu0 0.0
        %1450 = vmatpush.msra.mxu0 0.0
        %1451 = vmatpush.msra.mxu0 0.0
        %1452 = vmatpush.msra.mxu0 0.0
        %1453 = vmatpush.msra.mxu0 0.0
        %1454 = vmatpush.msra.mxu0 0.0
        %1455 = vmatpush.msra.mxu0 %v926
        %1456 = vmatmul.f32.gmra.mxu0 %v873
        %v1457 = vpop.f32.mrf.mxu0
        %v1458 = vadd.f32 %v802, %v1457
        %1459 = vdwg.mxu0
        %1460 = vmatpush.msra.mxu0 0.0
        %1461 = vmatpush.msra.mxu0 0.0
        %1462 = vmatpush.msra.mxu0 0.0
        %1463 = vmatpush.msra.mxu0 0.0
        %1464 = vmatpush.msra.mxu0 0.0
        %1465 = vmatpush.msra.mxu0 0.0
        %1466 = vmatpush.msra.mxu0 0.0
        %1467 = vmatpush.msra.mxu0 0.0
        %1468 = vmatpush.msra.mxu0 0.0
        %1469 = vmatpush.msra.mxu0 0.0
        %1470 = vmatpush.msra.mxu0 0.0
        %1471 = vmatpush.msra.mxu0 0.0
        %1472 = vmatpush.msra.mxu0 0.0
        %1473 = vmatpush.msra.mxu0 0.0
        %1474 = vmatpush.msra.mxu0 0.0
        %1475 = vmatpush.msra.mxu0 %v928
        %1476 = vmatmul.f32.gmra.mxu0 %v873
        %v1477 = vpop.f32.mrf.mxu0
        %v1478 = vadd.f32 %v802, %v1477
        %1479 = vdwg.mxu0
        %1480 = vmatpush.msra.mxu0 0.0
        %1481 = vmatpush.msra.mxu0 0.0
        %1482 = vmatpush.msra.mxu0 0.0
        %1483 = vmatpush.msra.mxu0 0.0
        %1484 = vmatpush.msra.mxu0 0.0
        %1485 = vmatpush.msra.mxu0 0.0
        %1486 = vmatpush.msra.mxu0 0.0
        %1487 = vmatpush.msra.mxu0 0.0
        %1488 = vmatpush.msra.mxu0 0.0
        %1489 = vmatpush.msra.mxu0 0.0
        %1490 = vmatpush.msra.mxu0 0.0
        %1491 = vmatpush.msra.mxu0 0.0
        %1492 = vmatpush.msra.mxu0 0.0
        %1493 = vmatpush.msra.mxu0 0.0
        %1494 = vmatpush.msra.mxu0 0.0
        %1495 = vmatpush.msra.mxu0 %v930
        %1496 = vmatmul.f32.gmra.mxu0 %v873
        %v1497 = vpop.f32.mrf.mxu0
        %v1498 = vadd.f32 %v802, %v1497
        %1499 = vdwg.mxu0
        %1500 = vmatpush.msra.mxu0 0.0
        %1501 = vmatpush.msra.mxu0 0.0
        %1502 = vmatpush.msra.mxu0 0.0
        %1503 = vmatpush.msra.mxu0 0.0
        %1504 = vmatpush.msra.mxu0 0.0
        %1505 = vmatpush.msra.mxu0 0.0
        %1506 = vmatpush.msra.mxu0 0.0
        %1507 = vmatpush.msra.mxu0 0.0
        %1508 = vmatpush.msra.mxu0 0.0
        %1509 = vmatpush.msra.mxu0 0.0
        %1510 = vmatpush.msra.mxu0 0.0
        %1511 = vmatpush.msra.mxu0 0.0
        %1512 = vmatpush.msra.mxu0 0.0
        %1513 = vmatpush.msra.mxu0 0.0
        %1514 = vmatpush.msra.mxu0 0.0
        %1515 = vmatpush.msra.mxu0 %v932
        %1516 = vmatmul.f32.gmra.mxu0 %v873
        %v1517 = vpop.f32.mrf.mxu0
        %v1518 = vadd.f32 %v802, %v1517
        %1519 = vdwg.mxu0
        %1520 = vmatpush.msra.mxu0 0.0
        %1521 = vmatpush.msra.mxu0 0.0
        %1522 = vmatpush.msra.mxu0 0.0
        %1523 = vmatpush.msra.mxu0 0.0
        %1524 = vmatpush.msra.mxu0 0.0
        %1525 = vmatpush.msra.mxu0 0.0
        %1526 = vmatpush.msra.mxu0 0.0
        %1527 = vmatpush.msra.mxu0 0.0
        %1528 = vmatpush.msra.mxu0 0.0
        %1529 = vmatpush.msra.mxu0 0.0
        %1530 = vmatpush.msra.mxu0 0.0
        %1531 = vmatpush.msra.mxu0 0.0
        %1532 = vmatpush.msra.mxu0 0.0
        %1533 = vmatpush.msra.mxu0 0.0
        %1534 = vmatpush.msra.mxu0 0.0
        %1535 = vmatpush.msra.mxu0 %v934
        %1536 = vmatmul.f32.gmra.mxu0 %v873
        %v1537 = vpop.f32.mrf.mxu0
        %v1538 = vadd.f32 %v802, %v1537
        %1539 = vdwg.mxu0
        %1540 = vmatpush.msra.mxu0 0.0
        %1541 = vmatpush.msra.mxu0 0.0
        %1542 = vmatpush.msra.mxu0 0.0
        %1543 = vmatpush.msra.mxu0 0.0
        %1544 = vmatpush.msra.mxu0 0.0
        %1545 = vmatpush.msra.mxu0 0.0
        %1546 = vmatpush.msra.mxu0 0.0
        %1547 = vmatpush.msra.mxu0 0.0
        %1548 = vmatpush.msra.mxu0 0.0
        %1549 = vmatpush.msra.mxu0 0.0
        %1550 = vmatpush.msra.mxu0 0.0
        %1551 = vmatpush.msra.mxu0 0.0
        %1552 = vmatpush.msra.mxu0 0.0
        %1553 = vmatpush.msra.mxu0 0.0
        %1554 = vmatpush.msra.mxu0 0.0
        %1555 = vmatpush.msra.mxu0 %v936
        %1556 = vmatmul.f32.gmra.mxu0 %v873
        %v1557 = vpop.f32.mrf.mxu0
        %v1558 = vadd.f32 %v802, %v1557
        %1559 = vdwg.mxu0
        %1560 = vmatpush.msra.mxu0 0.0
        %1561 = vmatpush.msra.mxu0 0.0
        %1562 = vmatpush.msra.mxu0 0.0
        %1563 = vmatpush.msra.mxu0 0.0
        %1564 = vmatpush.msra.mxu0 0.0
        %1565 = vmatpush.msra.mxu0 0.0
        %1566 = vmatpush.msra.mxu0 0.0
        %1567 = vmatpush.msra.mxu0 0.0
        %1568 = vmatpush.msra.mxu0 0.0
        %1569 = vmatpush.msra.mxu0 0.0
        %1570 = vmatpush.msra.mxu0 0.0
        %1571 = vmatpush.msra.mxu0 0.0
        %1572 = vmatpush.msra.mxu0 0.0
        %1573 = vmatpush.msra.mxu0 0.0
        %1574 = vmatpush.msra.mxu0 0.0
        %1575 = vmatpush.msra.mxu0 %v938
        %1576 = vmatmul.f32.gmra.mxu0 %v873
        %v1577 = vpop.f32.mrf.mxu0
        %v1578 = vadd.f32 %v802, %v1577
        %1579 = vdwg.mxu0
        %1580 = vst [vmem:[%s217] sm:$0xff] %v958
        %1581 = vst [vmem:[%s217 + $0x8] sm:$0xff] %v978
        %1582 = vst [vmem:[%s217 + $0x10] sm:$0xff] %v998
        %1583 = vst [vmem:[%s217 + $0x18] sm:$0xff] %v1018
        %1584 = vst [vmem:[%s217 + $0x20] sm:$0xff] %v1038
        %1585 = vst [vmem:[%s217 + $0x28] sm:$0xff] %v1058
        %1586 = vst [vmem:[%s217 + $0x30] sm:$0xff] %v1078
        %1587 = vst [vmem:[%s217 + $0x38] sm:$0xff] %v1098
        %1588 = vst [vmem:[%s217 + $0x40] sm:$0xff] %v1118
        %1589 = vst [vmem:[%s217 + $0x48] sm:$0xff] %v1138
        %1590 = vst [vmem:[%s217 + $0x50] sm:$0xff] %v1158
        %1591 = vst [vmem:[%s217 + $0x58] sm:$0xff] %v1178
        %1592 = vst [vmem:[%s217 + $0x60] sm:$0xff] %v1198
        %1593 = vst [vmem:[%s217 + $0x68] sm:$0xff] %v1218
        %1594 = vst [vmem:[%s217 + $0x70] sm:$0xff] %v1238
        %1595 = vst [vmem:[%s217 + $0x78] sm:$0xff] %v1258
        %1596 = vst [vmem:[%s217 + $0x80] sm:$0xff] %v1278
        %1597 = vst [vmem:[%s217 + $0x88] sm:$0xff] %v1298
        %1598 = vst [vmem:[%s217 + $0x90] sm:$0xff] %v1318
        %1599 = vst [vmem:[%s217 + $0x98] sm:$0xff] %v1338
        %1600 = vst [vmem:[%s217 + $0xa0] sm:$0xff] %v1358
        %1601 = vst [vmem:[%s217 + $0xa8] sm:$0xff] %v1378
        %1602 = vst [vmem:[%s217 + $0xb0] sm:$0xff] %v1398
        %1603 = vst [vmem:[%s217 + $0xb8] sm:$0xff] %v1418
        %1604 = vst [vmem:[%s217 + $0xc0] sm:$0xff] %v1438
        %1605 = vst [vmem:[%s217 + $0xc8] sm:$0xff] %v1458
        %1606 = vst [vmem:[%s217 + $0xd0] sm:$0xff] %v1478
        %1607 = vst [vmem:[%s217 + $0xd8] sm:$0xff] %v1498
        %1608 = vst [vmem:[%s217 + $0xe0] sm:$0xff] %v1518
        %1609 = vst [vmem:[%s217 + $0xe8] sm:$0xff] %v1538
        %1610 = vst [vmem:[%s217 + $0xf0] sm:$0xff] %v1558
        %1611 = vst [vmem:[%s217 + $0xf8] sm:$0xff] %v1578
        %s1612 = sand.u32 %s137, 1
        %s1613 = scalar_lea.sflag [#allocation3], %s1612
        %s1614 = sand.u32 %s137, 1
        %s1615 = smul.addr %s1614, 256
        %s1616 = scalar_lea.vmem [#allocation2], %s1615
        // Predicated region
        $region41: #{tpu_custom_call.1} parent=39 // pred_check
          %p1617 = pneg %p147
        $region42: #{tpu_custom_call.1} parent=39 // pred_check_branch
          %1619 = sbr.rel (%p1617) target = $region44
        $region43: #{tpu_custom_call.1} parent=39 // pred_region
          %1621 = vsyncadd %s1613, 0
          %s1622 = smul.addr %s19, 32
          %s1623 = smul.addr %s1622, 8
          %s1624 = scalar_lea.hbm %s5, %s1623
          %s1626 = sshll.u32 %s1616, 4
          %s1627 = int_to_ptr.vmem [resolvable:$true] %s1626
          %s1628 = sshll.u32 %s1624, 4
          %s1629 = int_to_ptr.hbm [resolvable:$true] %s1628
          %1631 = dma.vmem_to_hbm [thread:$0]  %s1627, 4096, %s1629, %s1613
        $region44: #{tpu_custom_call.1} parent=39 // pred_fallthru
          _
      $region40: #{tpu_custom_call.1} parent=5 // pred_fallthru
        _
      %p1632 = scmp.le.s32.totalorder 2, %s14
      // Predicated region
      $region45: #{tpu_custom_call.1} parent=5 // pred_check
        %p1633 = pneg %p1632
      $region46: #{tpu_custom_call.1} parent=5 // pred_check_branch
        %1635 = sbr.rel (%p1633) target = $region48
      $region47: #{tpu_custom_call.1} parent=5 // pred_region
        %s1636 = ssub.s32 %s14, 2
        // Predicated region
        $region49: #{tpu_custom_call.1} parent=47 // pred_check
          %p1637 = pneg %p153
        $region50: #{tpu_custom_call.1} parent=47 // pred_check_branch
          %1639 = sbr.rel (%p1637) target = $region52
        $region51: #{tpu_custom_call.1} parent=47 // pred_region
          %s1640 = sand.u32 %s138, 1
          %s1641 = scalar_lea.sflag [#allocation3], %s1640
          %s1642 = sand.u32 %s138, 1
          %s1643 = smul.addr %s1642, 256
          %s1644 = scalar_lea.vmem [#allocation2], %s1643
          %1646 = dma.done %s1641, 4096
        $region52: #{tpu_custom_call.1} parent=47 // pred_fallthru
          _
      $region48: #{tpu_custom_call.1} parent=5 // pred_fallthru
        _
    $region6: #{tpu_custom_call.1} parent=1 // loop_footer
      %s18 = sadd.s32 1, %s14
    $region7: #{tpu_custom_call.1} parent=1 // loop_footer_branch
      %13 = sbr.rel target = $region3
    $region8: #{tpu_custom_call.1} parent=1 // loop_exit
      _
    %1647 = vsyncpa [#allocation3], 1
    %s1648 = scalar_lea.sflag [#allocation3], 1
    %1649 = vsyncpa %s1648, 1

</llo_original>
